<compile_context>
chip_gen: v6e
topology: v6e:2x2x1
jax: 0.10.0
libtpu: 0.0.40
codegen_flags: <defaults>
</compile_context>

<pallas_src>
import math

import jax
import jax.numpy as jnp
from jax import lax
from jax.experimental import pallas as pl
from jax.experimental.pallas import tpu as pltpu

LN_EPS = 1e-5

_PARAM_ORDER = (
    "wqkv", "bqkv", "wo", "bo", "ln1g", "ln1b",
    "w1", "b1", "w2", "b2", "ln2g", "ln2b",
)


def _layer_norm(x, gamma, beta):
    mu = jnp.mean(x, axis=-1, keepdims=True)
    var = jnp.mean((x - mu) ** 2, axis=-1, keepdims=True)
    return (x - mu) * lax.rsqrt(var + LN_EPS) * gamma + beta


def _make_kernel(num_heads, matmul_dtype, with_attn):
    """Kernel for one (batch, layer) grid step; activation carried in VMEM scratch."""

    def kernel(*refs):
        if with_attn:
            x_ref, *w, out_ref, attn_ref, x_carry = refs
        else:
            x_ref, *w, out_ref, x_carry = refs
            attn_ref = None
        (wqkv_ref, bqkv_ref, wo_ref, bo_ref, ln1g_ref, ln1b_ref,
         w1_ref, b1_ref, w2_ref, b2_ref, ln2g_ref, ln2b_ref) = w

        l = pl.program_id(1)

        @pl.when(l == 0)
        def _():
            x_carry[...] = x_ref[0]          # seed the (S, D) f32 layer carry

        x = x_carry[...]                      # (S, D) f32
        S, D = x.shape
        H = num_heads
        dh = D // H
        scale = 1.0 / math.sqrt(dh)

        # ---- fused full-width QKV projection: (S, D) @ (D, 3D) on the MXU ----
        qkv = jnp.dot(x.astype(matmul_dtype), wqkv_ref[0],
                      preferred_element_type=jnp.float32) + bqkv_ref[0]   # (S, 3D) f32

        # ---- split heads (static lane slices; lane-aligned once dh % 128 == 0) ----
        def split_heads(base):
            return jnp.stack(
                [qkv[:, base + h * dh: base + (h + 1) * dh] for h in range(H)],
                axis=0)                                                    # (H, S, dh)

        qh = (split_heads(0) * scale).astype(matmul_dtype)
        kh = split_heads(D).astype(matmul_dtype)
        vh = split_heads(2 * D).astype(matmul_dtype)

        # ---- head-batched attention ----
        # TODO(synk): attention mask path (forward is always called with mask=None).
        scores = jnp.einsum("hqd,hkd->hqk", qh, kh,
                            preferred_element_type=jnp.float32)            # (H, S, S)
        scores = scores - jnp.max(scores, axis=-1, keepdims=True)
        p = jnp.exp(scores)
        probs = p / jnp.sum(p, axis=-1, keepdims=True)   # exact divide: rows sum to 1
        if attn_ref is not None:
            # TODO(synk): at realistic S, pad/flatten this store so the last dim is a
            # 128-multiple (lane-dense vst) and consider emitting bf16 probabilities.
            attn_ref[0] = probs

        ctx = jnp.einsum("hqk,hkd->hqd", probs.astype(matmul_dtype), vh,
                         preferred_element_type=jnp.float32)               # (H, S, dh)

        # ---- merge heads + single full-depth output projection (K = D) ----
        merged = jnp.concatenate([ctx[h] for h in range(H)], axis=-1)      # (S, D)
        attn_out = jnp.dot(merged.astype(matmul_dtype), wo_ref[0],
                           preferred_element_type=jnp.float32) + bo_ref[0]

        # ---- residual + LayerNorm 1 (dropout == identity at inference) ----
        y = _layer_norm(x + attn_out, ln1g_ref[0], ln1b_ref[0])

        # ---- position-wise feed-forward (ReLU) ----
        h1 = jnp.maximum(
            jnp.dot(y.astype(matmul_dtype), w1_ref[0],
                    preferred_element_type=jnp.float32) + b1_ref[0], 0.0)
        ff = jnp.dot(h1.astype(matmul_dtype), w2_ref[0],
                     preferred_element_type=jnp.float32) + b2_ref[0]

        # ---- residual + LayerNorm 2 ----
        x_new = _layer_norm(y + ff, ln2g_ref[0], ln2b_ref[0])

        x_carry[...] = x_new
        out_ref[0] = x_new    # out block index is constant along l; last layer wins

    return kernel


def _stack_params(layer_params_list, matmul_dtype):
    """Host-side packing: fused (D, 3D) QKV weights, matmul weights in bf16,
    all stacked with a leading layer axis for per-layer streaming."""
    def stack(name, dtype=None):
        a = jnp.stack([p[name] for p in layer_params_list])
        return a.astype(dtype) if dtype is not None else a

    wqkv = jnp.stack([jnp.concatenate([p["wq"], p["wk"], p["wv"]], axis=-1)
                      for p in layer_params_list]).astype(matmul_dtype)
    bqkv = jnp.stack([jnp.concatenate([p["bq"], p["bk"], p["bv"]], axis=-1)
                      for p in layer_params_list])
    return {
        "wqkv": wqkv, "bqkv": bqkv,
        "wo": stack("wo", matmul_dtype), "bo": stack("bo"),
        "ln1g": stack("ln1g"), "ln1b": stack("ln1b"),
        "w1": stack("w1", matmul_dtype), "b1": stack("b1"),
        "w2": stack("w2", matmul_dtype), "b2": stack("b2"),
        "ln2g": stack("ln2g"), "ln2b": stack("ln2b"),
    }


def _vmem_limit_bytes(stacked, S, D, H, return_attn):
    """Scoped-VMEM request sized to actual residency (2x for double-buffered
    per-layer weights and activation/attention blocks), with generous headroom
    for (8,128)-tile padding and Mosaic internal scratch."""
    per_layer = sum(int(math.prod(v.shape[1:])) * v.dtype.itemsize
                    for v in stacked.values())
    act = S * D * 4
    attn = H * S * S * 4 if return_attn else 0
    working = 2 * (per_layer + 2 * act + attn) + act
    return int(min(max(4 * working, 16 * 1024 * 1024), 64 * 1024 * 1024))


def transformer_encoder(x, layer_params_list, num_heads, mask=None,
                        matmul_dtype=jnp.bfloat16, return_attn=True):
    """Matches TransformerEncoder.forward: returns (x, [attn_scores per layer])."""
    assert mask is None  # TODO(synk): masked-attention path not implemented.
    B, S, D = x.shape
    L = len(layer_params_list)
    H = num_heads
    stacked = _stack_params(layer_params_list, matmul_dtype)

    def wspec(arr):                     # per-layer weight block, streamed over l
        nrest = arr.ndim - 1
        return pl.BlockSpec((1,) + arr.shape[1:],
                            lambda b, l, _n=nrest: (l,) + (0,) * _n)

    in_specs = [pl.BlockSpec((1, S, D), lambda b, l: (b, 0, 0))]
    in_specs += [wspec(stacked[name]) for name in _PARAM_ORDER]

    if return_attn:
        out_shape = (jax.ShapeDtypeStruct((B, S, D), jnp.float32),
                     jax.ShapeDtypeStruct((B * L, H, S, S), jnp.float32))
        out_specs = (pl.BlockSpec((1, S, D), lambda b, l: (b, 0, 0)),
                     pl.BlockSpec((1, H, S, S),
                                  lambda b, l: (b * L + l, 0, 0, 0)))
    else:
        out_shape = jax.ShapeDtypeStruct((B, S, D), jnp.float32)
        out_specs = pl.BlockSpec((1, S, D), lambda b, l: (b, 0, 0))

    kernel = _make_kernel(H, matmul_dtype, return_attn)
    results = pl.pallas_call(
        kernel,
        out_shape=out_shape,
        grid_spec=pltpu.PrefetchScalarGridSpec(
            num_scalar_prefetch=0,
            grid=(B, L),                       # batch parallel, layers sequential
            in_specs=in_specs,
            out_specs=out_specs,
            scratch_shapes=[pltpu.VMEM((S, D), jnp.float32)],   # layer carry
        ),
        compiler_params=pltpu.CompilerParams(
            dimension_semantics=("parallel", "arbitrary"),
            vmem_limit_bytes=_vmem_limit_bytes(stacked, S, D, H, return_attn),
        ),
    )(x, *[stacked[name] for name in _PARAM_ORDER])

    if return_attn:
        out, attn = results
        attn = attn.reshape(B, L, H, S, S)
        return out, [attn[:, li] for li in range(L)]
    return results, []


def init_layer_params(key, d_model, dim_feedforward):
    ks = jax.random.split(key, 6)
    s = 1.0 / math.sqrt(d_model)
    sf = 1.0 / math.sqrt(dim_feedforward)
    return {
        "wq": jax.random.uniform(ks[0], (d_model, d_model), jnp.float32, -s, s),
        "bq": jnp.zeros((1, d_model), jnp.float32),
        "wk": jax.random.uniform(ks[1], (d_model, d_model), jnp.float32, -s, s),
        "bk": jnp.zeros((1, d_model), jnp.float32),
        "wv": jax.random.uniform(ks[2], (d_model, d_model), jnp.float32, -s, s),
        "bv": jnp.zeros((1, d_model), jnp.float32),
        "wo": jax.random.uniform(ks[3], (d_model, d_model), jnp.float32, -s, s),
        "bo": jnp.zeros((1, d_model), jnp.float32),
        "ln1g": jnp.ones((1, d_model), jnp.float32),
        "ln1b": jnp.zeros((1, d_model), jnp.float32),
        "w1": jax.random.uniform(ks[4], (d_model, dim_feedforward), jnp.float32, -s, s),
        "b1": jnp.zeros((1, dim_feedforward), jnp.float32),
        "w2": jax.random.uniform(ks[5], (dim_feedforward, d_model), jnp.float32, -sf, sf),
        "b2": jnp.zeros((1, d_model), jnp.float32),
        "ln2g": jnp.ones((1, d_model), jnp.float32),
        "ln2b": jnp.zeros((1, d_model), jnp.float32),
    }


def _reference_encoder(x, layer_params_list, num_heads):
    """Pure-JAX f32 reference of the same forward pass (correctness check)."""
    B, S, D = x.shape
    H = num_heads
    dh = D // H
    attn_list = []
    for p in layer_params_list:
        q = x @ p["wq"] + p["bq"]
        k = x @ p["wk"] + p["bk"]
        v = x @ p["wv"] + p["bv"]

        def heads(t):
            return t.reshape(B, S, H, dh).transpose(0, 2, 1, 3)

        qh, kh, vh = heads(q), heads(k), heads(v)
        s = jnp.einsum("bhqe,bhke->bhqk", qh, kh) / math.sqrt(dh)
        a = jax.nn.softmax(s, axis=-1)
        attn_list.append(a)
        ctx = jnp.einsum("bhqk,bhke->bhqe", a, vh)
        merged = ctx.transpose(0, 2, 1, 3).reshape(B, S, D)
        y = _layer_norm(x + merged @ p["wo"] + p["bo"], p["ln1g"], p["ln1b"])
        h1 = jnp.maximum(y @ p["w1"] + p["b1"], 0.0)
        x = _layer_norm(y + h1 @ p["w2"] + p["b2"], p["ln2g"], p["ln2b"])
    return x, attn_list


if __name__ == "__main__":
    num_layers = 2
    d_model = 32
    num_heads = 4
    dim_feedforward = 4 * d_model     # default in the module __init__
    batch, seq = 2, 8
    # dropout=0.1 in the module; inference/eval mode => identity (no-op here).

    key = jax.random.PRNGKey(0)
    k_x, k_p = jax.random.split(key)
    x = jax.random.normal(k_x, (batch, seq, d_model), jnp.float32)

    # Note: the torch module clones() one layer (identical initial weights);
    # distinct per-layer params are used here purely to exercise the per-layer
    # streaming -- forward semantics do not depend on initialization.
    layer_keys = jax.random.split(k_p, num_layers)
    layer_params = [init_layer_params(k, d_model, dim_feedforward) for k in layer_keys]

    out, attn_list = transformer_encoder(x, layer_params, num_heads)
    out = jax.block_until_ready(out)
    attn_list = [jax.block_until_ready(a) for a in attn_list]

    assert out.shape == (batch, seq, d_model)
    assert len(attn_list) == num_layers
    assert all(a.shape == (batch, num_heads, seq, seq) for a in attn_list)
    # exact softmax divide => stored probability rows sum to 1
    assert bool(jnp.allclose(jnp.sum(attn_list[0], axis=-1), 1.0, atol=1e-3))

    # numerical parity with a pure-JAX f32 reference (kernel matmuls run with
    # bf16 operands / f32 accumulation, hence the tolerances)
    with jax.default_matmul_precision("highest"):
        ref_out, ref_attn = _reference_encoder(x, layer_params, num_heads)
    assert bool(jnp.allclose(out, ref_out, atol=7e-2, rtol=7e-2))
    assert all(bool(jnp.allclose(a, r, atol=2e-2, rtol=2e-2))
               for a, r in zip(attn_list, ref_attn))

    # the attention-probability output is optional (skips its HBM stores)
    out_noattn, empty = transformer_encoder(x, layer_params, num_heads,
                                            return_attn=False)
    out_noattn = jax.block_until_ready(out_noattn)
    assert empty == []
    assert bool(jnp.allclose(out_noattn, out, atol=1e-5, rtol=1e-5))

    print("KERNEL_OK")
</pallas_src>

<mosaic_0001>
module attributes {stable_mosaic.version = 11 : i64} {
  func.func @kernel(%arg0: i32, %arg1: i32, %arg2: memref<1x8x32xf32, #tpu.memory_space<vmem>>, %arg3: memref<1x32x96xbf16, #tpu.memory_space<vmem>>, %arg4: memref<1x1x96xf32, #tpu.memory_space<vmem>>, %arg5: memref<1x32x32xbf16, #tpu.memory_space<vmem>>, %arg6: memref<1x1x32xf32, #tpu.memory_space<vmem>>, %arg7: memref<1x1x32xf32, #tpu.memory_space<vmem>>, %arg8: memref<1x1x32xf32, #tpu.memory_space<vmem>>, %arg9: memref<1x32x128xbf16, #tpu.memory_space<vmem>>, %arg10: memref<1x1x128xf32, #tpu.memory_space<vmem>>, %arg11: memref<1x128x32xbf16, #tpu.memory_space<vmem>>, %arg12: memref<1x1x32xf32, #tpu.memory_space<vmem>>, %arg13: memref<1x1x32xf32, #tpu.memory_space<vmem>>, %arg14: memref<1x1x32xf32, #tpu.memory_space<vmem>>, %arg15: memref<1x8x32xf32, #tpu.memory_space<vmem>>, %arg16: memref<1x4x8x8xf32, #tpu.memory_space<vmem>>, %arg17: memref<8x32xf32, #tpu.memory_space<vmem>>) attributes {dimension_semantics = [#tpu.dimension_semantics<parallel>, #tpu.dimension_semantics<arbitrary>], iteration_bounds = array<i64: 2, 2>, scalar_prefetch = 0 : i64, scratch_operands = 1 : i64, tpu.core_type = #tpu.core_type<tc>, window_params = [{transform_indices = @transform_0, window_bounds = array<i64: 1, 8, 32>}, {transform_indices = @transform_1, window_bounds = array<i64: 1, 32, 96>}, {transform_indices = @transform_2, window_bounds = array<i64: 1, 1, 96>}, {transform_indices = @transform_3, window_bounds = array<i64: 1, 32, 32>}, {transform_indices = @transform_4, window_bounds = array<i64: 1, 1, 32>}, {transform_indices = @transform_5, window_bounds = array<i64: 1, 1, 32>}, {transform_indices = @transform_6, window_bounds = array<i64: 1, 1, 32>}, {transform_indices = @transform_7, window_bounds = array<i64: 1, 32, 128>}, {transform_indices = @transform_8, window_bounds = array<i64: 1, 1, 128>}, {transform_indices = @transform_9, window_bounds = array<i64: 1, 128, 32>}, {transform_indices = @transform_10, window_bounds = array<i64: 1, 1, 32>}, {transform_indices = @transform_11, window_bounds = array<i64: 1, 1, 32>}, {transform_indices = @transform_12, window_bounds = array<i64: 1, 1, 32>}, {transform_indices = @transform_13, window_bounds = array<i64: 1, 8, 32>}, {transform_indices = @transform_14, window_bounds = array<i64: 1, 4, 8, 8>}]} {
    %c0_i32 = arith.constant 0 : i32
    %0 = arith.cmpi eq, %arg1, %c0_i32 : i32
    %1 = arith.extui %0 : i1 to i32
    %c0_i32_0 = arith.constant 0 : i32
    %2 = arith.cmpi ne, %1, %c0_i32_0 : i32
    scf.if %2 {
      %c0_66 = arith.constant 0 : index
      %c0_67 = arith.constant 0 : index
      %c0_68 = arith.constant 0 : index
      %152 = vector.load %arg2[%c0_66, %c0_67, %c0_68] : memref<1x8x32xf32, #tpu.memory_space<vmem>>, vector<1x8x32xf32>
      %153 = vector.shape_cast %152 : vector<1x8x32xf32> to vector<8x32xf32>
      %c0_69 = arith.constant 0 : index
      %c0_70 = arith.constant 0 : index
      %154 = vector.load %arg17[%c0_69, %c0_70] : memref<8x32xf32, #tpu.memory_space<vmem>>, vector<8x32xf32>
      tpu.vector_store %arg17[%c0_69, %c0_70], %153 {strides = array<i32>} : memref<8x32xf32, #tpu.memory_space<vmem>>, vector<8x32xf32>,
    } else {
    }
    %c0 = arith.constant 0 : index
    %c0_1 = arith.constant 0 : index
    %3 = vector.load %arg17[%c0, %c0_1] : memref<8x32xf32, #tpu.memory_space<vmem>>, vector<8x32xf32>
    %4 = arith.truncf %3 : vector<8x32xf32> to vector<8x32xbf16>
    %c0_2 = arith.constant 0 : index
    %c0_3 = arith.constant 0 : index
    %c0_4 = arith.constant 0 : index
    %5 = vector.load %arg3[%c0_2, %c0_3, %c0_4] : memref<1x32x96xbf16, #tpu.memory_space<vmem>>, vector<1x32x96xbf16>
    %6 = vector.shape_cast %5 : vector<1x32x96xbf16> to vector<32x96xbf16>
    %cst = arith.constant dense<0.000000e+00> : vector<8x96xf32>
    %7 = tpu.matmul %4, %6, %cst {dimension_numbers = #tpu.dot_dimension_numbers<[1], [0], [0], [1], [0, 0, 1, 1], [], []>} : vector<8x32xbf16>, vector<32x96xbf16>, vector<8x96xf32> -> vector<8x96xf32>
    %c0_5 = arith.constant 0 : index
    %c0_6 = arith.constant 0 : index
    %c0_7 = arith.constant 0 : index
    %8 = vector.load %arg4[%c0_5, %c0_6, %c0_7] : memref<1x1x96xf32, #tpu.memory_space<vmem>>, vector<1x1x96xf32>
    %9 = vector.shape_cast %8 : vector<1x1x96xf32> to vector<1x96xf32>
    %10 = vector.broadcast %9 : vector<1x96xf32> to vector<8x96xf32>
    %11 = arith.addf %7, %10 : vector<8x96xf32>
    %12 = vector.extract_strided_slice %11 {offsets = [0, 0], sizes = [8, 8], strides = [1, 1]} : vector<8x96xf32> to vector<8x8xf32>
    %13 = vector.extract_strided_slice %11 {offsets = [0, 8], sizes = [8, 8], strides = [1, 1]} : vector<8x96xf32> to vector<8x8xf32>
    %14 = vector.extract_strided_slice %11 {offsets = [0, 16], sizes = [8, 8], strides = [1, 1]} : vector<8x96xf32> to vector<8x8xf32>
    %15 = vector.extract_strided_slice %11 {offsets = [0, 24], sizes = [8, 8], strides = [1, 1]} : vector<8x96xf32> to vector<8x8xf32>
    %16 = vector.shape_cast %12 : vector<8x8xf32> to vector<1x8x8xf32>
    %17 = vector.shape_cast %13 : vector<8x8xf32> to vector<1x8x8xf32>
    %18 = vector.shape_cast %14 : vector<8x8xf32> to vector<1x8x8xf32>
    %19 = vector.shape_cast %15 : vector<8x8xf32> to vector<1x8x8xf32>
    %20 = tpu.concatenate %16, %17, %18, %19 in 0 : vector<1x8x8xf32>, vector<1x8x8xf32>, vector<1x8x8xf32>, vector<1x8x8xf32> -> vector<4x8x8xf32>
    %cst_8 = arith.constant 0.353553385 : f32
    %21 = vector.broadcast %cst_8 : f32 to vector<4x8x8xf32>
    %22 = arith.mulf %20, %21 : vector<4x8x8xf32>
    %23 = arith.truncf %22 : vector<4x8x8xf32> to vector<4x8x8xbf16>
    %24 = vector.extract_strided_slice %11 {offsets = [0, 32], sizes = [8, 8], strides = [1, 1]} : vector<8x96xf32> to vector<8x8xf32>
    %25 = vector.extract_strided_slice %11 {offsets = [0, 40], sizes = [8, 8], strides = [1, 1]} : vector<8x96xf32> to vector<8x8xf32>
    %26 = vector.extract_strided_slice %11 {offsets = [0, 48], sizes = [8, 8], strides = [1, 1]} : vector<8x96xf32> to vector<8x8xf32>
    %27 = vector.extract_strided_slice %11 {offsets = [0, 56], sizes = [8, 8], strides = [1, 1]} : vector<8x96xf32> to vector<8x8xf32>
    %28 = vector.shape_cast %24 : vector<8x8xf32> to vector<1x8x8xf32>
    %29 = vector.shape_cast %25 : vector<8x8xf32> to vector<1x8x8xf32>
    %30 = vector.shape_cast %26 : vector<8x8xf32> to vector<1x8x8xf32>
    %31 = vector.shape_cast %27 : vector<8x8xf32> to vector<1x8x8xf32>
    %32 = tpu.concatenate %28, %29, %30, %31 in 0 : vector<1x8x8xf32>, vector<1x8x8xf32>, vector<1x8x8xf32>, vector<1x8x8xf32> -> vector<4x8x8xf32>
    %33 = arith.truncf %32 : vector<4x8x8xf32> to vector<4x8x8xbf16>
    %34 = vector.extract_strided_slice %11 {offsets = [0, 64], sizes = [8, 8], strides = [1, 1]} : vector<8x96xf32> to vector<8x8xf32>
    %35 = vector.extract_strided_slice %11 {offsets = [0, 72], sizes = [8, 8], strides = [1, 1]} : vector<8x96xf32> to vector<8x8xf32>
    %36 = vector.extract_strided_slice %11 {offsets = [0, 80], sizes = [8, 8], strides = [1, 1]} : vector<8x96xf32> to vector<8x8xf32>
    %37 = vector.extract_strided_slice %11 {offsets = [0, 88], sizes = [8, 8], strides = [1, 1]} : vector<8x96xf32> to vector<8x8xf32>
    %38 = vector.shape_cast %34 : vector<8x8xf32> to vector<1x8x8xf32>
    %39 = vector.shape_cast %35 : vector<8x8xf32> to vector<1x8x8xf32>
    %40 = vector.shape_cast %36 : vector<8x8xf32> to vector<1x8x8xf32>
    %41 = vector.shape_cast %37 : vector<8x8xf32> to vector<1x8x8xf32>
    %42 = tpu.concatenate %38, %39, %40, %41 in 0 : vector<1x8x8xf32>, vector<1x8x8xf32>, vector<1x8x8xf32>, vector<1x8x8xf32> -> vector<4x8x8xf32>
    %43 = arith.truncf %42 : vector<4x8x8xf32> to vector<4x8x8xbf16>
    "tpu.trace_start"() <{level = 10 : i32, message = "hqd,hkd->hqk"}> : () -> ()
    %cst_9 = arith.constant dense<0.000000e+00> : vector<4x8x8xf32>
    %44 = tpu.matmul %23, %33, %cst_9 {dimension_numbers = #tpu.dot_dimension_numbers<[2], [2], [1], [1], [0, 0, 0, 1, 1, 1], [0], [0]>} : vector<4x8x8xbf16>, vector<4x8x8xbf16>, vector<4x8x8xf32> -> vector<4x8x8xf32>
    "tpu.trace_stop"() : () -> ()
    %cst_10 = arith.constant dense<0xFF800000> : vector<4x8xf32>
    %45 = vector.multi_reduction <maximumf>, %44, %cst_10 [2] : vector<4x8x8xf32> to vector<4x8xf32>
    %46 = vector.shape_cast %45 : vector<4x8xf32> to vector<4x8x1xf32>
    %47 = vector.broadcast %46 : vector<4x8x1xf32> to vector<4x8x8xf32>
    %48 = arith.subf %44, %47 : vector<4x8x8xf32>
    %49 = math.exp %48 : vector<4x8x8xf32>
    %cst_11 = arith.constant dense<0.000000e+00> : vector<4x8xf32>
    %50 = vector.multi_reduction <add>, %49, %cst_11 [2] : vector<4x8x8xf32> to vector<4x8xf32>
    %51 = vector.shape_cast %50 : vector<4x8xf32> to vector<4x8x1xf32>
    %52 = vector.broadcast %51 : vector<4x8x1xf32> to vector<4x8x8xf32>
    %53 = arith.divf %49, %52 : vector<4x8x8xf32>
    %c0_12 = arith.constant 0 : index
    %c0_13 = arith.constant 0 : index
    %c0_14 = arith.constant 0 : index
    %c0_15 = arith.constant 0 : index
    %54 = vector.load %arg16[%c0_12, %c0_13, %c0_14, %c0_15] : memref<1x4x8x8xf32, #tpu.memory_space<vmem>>, vector<1x4x8x8xf32>
    %55 = vector.shape_cast %54 : vector<1x4x8x8xf32> to vector<4x8x8xf32>
    %56 = vector.shape_cast %53 : vector<4x8x8xf32> to vector<1x4x8x8xf32>
    tpu.vector_store %arg16[%c0_12, %c0_13, %c0_14, %c0_15], %56 {strides = array<i32>} : memref<1x4x8x8xf32, #tpu.memory_space<vmem>>, vector<1x4x8x8xf32>,
    %57 = arith.truncf %53 : vector<4x8x8xf32> to vector<4x8x8xbf16>
    "tpu.trace_start"() <{level = 10 : i32, message = "hqk,hkd->hqd"}> : () -> ()
    %cst_16 = arith.constant dense<0.000000e+00> : vector<4x8x8xf32>
    %58 = tpu.matmul %57, %43, %cst_16 {dimension_numbers = #tpu.dot_dimension_numbers<[2], [1], [1], [2], [0, 0, 0, 1, 1, 2], [0], [0]>} : vector<4x8x8xbf16>, vector<4x8x8xbf16>, vector<4x8x8xf32> -> vector<4x8x8xf32>
    "tpu.trace_stop"() : () -> ()
    %59 = vector.extract_strided_slice %58 {offsets = [0, 0, 0], sizes = [1, 8, 8], strides = [1, 1, 1]} : vector<4x8x8xf32> to vector<1x8x8xf32>
    %60 = vector.shape_cast %59 : vector<1x8x8xf32> to vector<8x8xf32>
    %61 = vector.extract_strided_slice %58 {offsets = [1, 0, 0], sizes = [1, 8, 8], strides = [1, 1, 1]} : vector<4x8x8xf32> to vector<1x8x8xf32>
    %62 = vector.shape_cast %61 : vector<1x8x8xf32> to vector<8x8xf32>
    %63 = vector.extract_strided_slice %58 {offsets = [2, 0, 0], sizes = [1, 8, 8], strides = [1, 1, 1]} : vector<4x8x8xf32> to vector<1x8x8xf32>
    %64 = vector.shape_cast %63 : vector<1x8x8xf32> to vector<8x8xf32>
    %65 = vector.extract_strided_slice %58 {offsets = [3, 0, 0], sizes = [1, 8, 8], strides = [1, 1, 1]} : vector<4x8x8xf32> to vector<1x8x8xf32>
    %66 = vector.shape_cast %65 : vector<1x8x8xf32> to vector<8x8xf32>
    %67 = tpu.concatenate %60, %62, %64, %66 in 1 : vector<8x8xf32>, vector<8x8xf32>, vector<8x8xf32>, vector<8x8xf32> -> vector<8x32xf32>
    %68 = arith.truncf %67 : vector<8x32xf32> to vector<8x32xbf16>
    %c0_17 = arith.constant 0 : index
    %c0_18 = arith.constant 0 : index
    %c0_19 = arith.constant 0 : index
    %69 = vector.load %arg5[%c0_17, %c0_18, %c0_19] : memref<1x32x32xbf16, #tpu.memory_space<vmem>>, vector<1x32x32xbf16>
    %70 = vector.shape_cast %69 : vector<1x32x32xbf16> to vector<32x32xbf16>
    %cst_20 = arith.constant dense<0.000000e+00> : vector<8x32xf32>
    %71 = tpu.matmul %68, %70, %cst_20 {dimension_numbers = #tpu.dot_dimension_numbers<[1], [0], [0], [1], [0, 0, 1, 1], [], []>} : vector<8x32xbf16>, vector<32x32xbf16>, vector<8x32xf32> -> vector<8x32xf32>
    %c0_21 = arith.constant 0 : index
    %c0_22 = arith.constant 0 : index
    %c0_23 = arith.constant 0 : index
    %72 = vector.load %arg6[%c0_21, %c0_22, %c0_23] : memref<1x1x32xf32, #tpu.memory_space<vmem>>, vector<1x1x32xf32>
    %73 = vector.shape_cast %72 : vector<1x1x32xf32> to vector<1x32xf32>
    %74 = vector.broadcast %73 : vector<1x32xf32> to vector<8x32xf32>
    %75 = arith.addf %71, %74 : vector<8x32xf32>
    %76 = arith.addf %3, %75 : vector<8x32xf32>
    %c0_24 = arith.constant 0 : index
    %c0_25 = arith.constant 0 : index
    %c0_26 = arith.constant 0 : index
    %77 = vector.load %arg7[%c0_24, %c0_25, %c0_26] : memref<1x1x32xf32, #tpu.memory_space<vmem>>, vector<1x1x32xf32>
    %78 = vector.shape_cast %77 : vector<1x1x32xf32> to vector<1x32xf32>
    %c0_27 = arith.constant 0 : index
    %c0_28 = arith.constant 0 : index
    %c0_29 = arith.constant 0 : index
    %79 = vector.load %arg8[%c0_27, %c0_28, %c0_29] : memref<1x1x32xf32, #tpu.memory_space<vmem>>, vector<1x1x32xf32>
    %80 = vector.shape_cast %79 : vector<1x1x32xf32> to vector<1x32xf32>
    %cst_30 = arith.constant dense<0.000000e+00> : vector<8xf32>
    %81 = vector.multi_reduction <add>, %76, %cst_30 [1] : vector<8x32xf32> to vector<8xf32>
    %82 = vector.shape_cast %81 : vector<8xf32> to vector<8x1xf32>
    %cst_31 = arith.constant 3.200000e+01 : f32
    %83 = vector.broadcast %cst_31 : f32 to vector<8x1xf32>
    %84 = arith.divf %82, %83 : vector<8x1xf32>
    %85 = vector.broadcast %84 : vector<8x1xf32> to vector<8x32xf32>
    %86 = arith.subf %76, %85 : vector<8x32xf32>
    %87 = arith.mulf %86, %86 : vector<8x32xf32>
    %cst_32 = arith.constant dense<0.000000e+00> : vector<8xf32>
    %88 = vector.multi_reduction <add>, %87, %cst_32 [1] : vector<8x32xf32> to vector<8xf32>
    %89 = vector.shape_cast %88 : vector<8xf32> to vector<8x1xf32>
    %cst_33 = arith.constant 3.200000e+01 : f32
    %90 = vector.broadcast %cst_33 : f32 to vector<8x1xf32>
    %91 = arith.divf %89, %90 : vector<8x1xf32>
    %92 = vector.broadcast %84 : vector<8x1xf32> to vector<8x32xf32>
    %93 = arith.subf %76, %92 : vector<8x32xf32>
    %cst_34 = arith.constant 9.99999974E-6 : f32
    %94 = vector.broadcast %cst_34 : f32 to vector<8x1xf32>
    %95 = arith.addf %91, %94 : vector<8x1xf32>
    %96 = math.rsqrt %95 : vector<8x1xf32>
    %97 = vector.broadcast %96 : vector<8x1xf32> to vector<8x32xf32>
    %98 = arith.mulf %93, %97 : vector<8x32xf32>
    %99 = vector.broadcast %78 : vector<1x32xf32> to vector<8x32xf32>
    %100 = arith.mulf %98, %99 : vector<8x32xf32>
    %101 = vector.broadcast %80 : vector<1x32xf32> to vector<8x32xf32>
    %102 = arith.addf %100, %101 : vector<8x32xf32>
    %103 = arith.truncf %102 : vector<8x32xf32> to vector<8x32xbf16>
    %c0_35 = arith.constant 0 : index
    %c0_36 = arith.constant 0 : index
    %c0_37 = arith.constant 0 : index
    %104 = vector.load %arg9[%c0_35, %c0_36, %c0_37] : memref<1x32x128xbf16, #tpu.memory_space<vmem>>, vector<1x32x128xbf16>
    %105 = vector.shape_cast %104 : vector<1x32x128xbf16> to vector<32x128xbf16>
    %cst_38 = arith.constant dense<0.000000e+00> : vector<8x128xf32>
    %106 = tpu.matmul %103, %105, %cst_38 {dimension_numbers = #tpu.dot_dimension_numbers<[1], [0], [0], [1], [0, 0, 1, 1], [], []>} : vector<8x32xbf16>, vector<32x128xbf16>, vector<8x128xf32> -> vector<8x128xf32>
    %c0_39 = arith.constant 0 : index
    %c0_40 = arith.constant 0 : index
    %c0_41 = arith.constant 0 : index
    %107 = vector.load %arg10[%c0_39, %c0_40, %c0_41] : memref<1x1x128xf32, #tpu.memory_space<vmem>>, vector<1x1x128xf32>
    %108 = vector.shape_cast %107 : vector<1x1x128xf32> to vector<1x128xf32>
    %109 = vector.broadcast %108 : vector<1x128xf32> to vector<8x128xf32>
    %110 = arith.addf %106, %109 : vector<8x128xf32>
    %cst_42 = arith.constant 0.000000e+00 : f32
    %111 = vector.broadcast %cst_42 : f32 to vector<8x128xf32>
    %112 = arith.maximumf %110, %111 : vector<8x128xf32>
    %113 = arith.truncf %112 : vector<8x128xf32> to vector<8x128xbf16>
    %c0_43 = arith.constant 0 : index
    %c0_44 = arith.constant 0 : index
    %c0_45 = arith.constant 0 : index
    %114 = vector.load %arg11[%c0_43, %c0_44, %c0_45] : memref<1x128x32xbf16, #tpu.memory_space<vmem>>, vector<1x128x32xbf16>
    %115 = vector.shape_cast %114 : vector<1x128x32xbf16> to vector<128x32xbf16>
    %cst_46 = arith.constant dense<0.000000e+00> : vector<8x32xf32>
    %116 = tpu.matmul %113, %115, %cst_46 {dimension_numbers = #tpu.dot_dimension_numbers<[1], [0], [0], [1], [0, 0, 1, 1], [], []>} : vector<8x128xbf16>, vector<128x32xbf16>, vector<8x32xf32> -> vector<8x32xf32>
    %c0_47 = arith.constant 0 : index
    %c0_48 = arith.constant 0 : index
    %c0_49 = arith.constant 0 : index
    %117 = vector.load %arg12[%c0_47, %c0_48, %c0_49] : memref<1x1x32xf32, #tpu.memory_space<vmem>>, vector<1x1x32xf32>
    %118 = vector.shape_cast %117 : vector<1x1x32xf32> to vector<1x32xf32>
    %119 = vector.broadcast %118 : vector<1x32xf32> to vector<8x32xf32>
    %120 = arith.addf %116, %119 : vector<8x32xf32>
    %121 = arith.addf %102, %120 : vector<8x32xf32>
    %c0_50 = arith.constant 0 : index
    %c0_51 = arith.constant 0 : index
    %c0_52 = arith.constant 0 : index
    %122 = vector.load %arg13[%c0_50, %c0_51, %c0_52] : memref<1x1x32xf32, #tpu.memory_space<vmem>>, vector<1x1x32xf32>
    %123 = vector.shape_cast %122 : vector<1x1x32xf32> to vector<1x32xf32>
    %c0_53 = arith.constant 0 : index
    %c0_54 = arith.constant 0 : index
    %c0_55 = arith.constant 0 : index
    %124 = vector.load %arg14[%c0_53, %c0_54, %c0_55] : memref<1x1x32xf32, #tpu.memory_space<vmem>>, vector<1x1x32xf32>
    %125 = vector.shape_cast %124 : vector<1x1x32xf32> to vector<1x32xf32>
    %cst_56 = arith.constant dense<0.000000e+00> : vector<8xf32>
    %126 = vector.multi_reduction <add>, %121, %cst_56 [1] : vector<8x32xf32> to vector<8xf32>
    %127 = vector.shape_cast %126 : vector<8xf32> to vector<8x1xf32>
    %cst_57 = arith.constant 3.200000e+01 : f32
    %128 = vector.broadcast %cst_57 : f32 to vector<8x1xf32>
    %129 = arith.divf %127, %128 : vector<8x1xf32>
    %130 = vector.broadcast %129 : vector<8x1xf32> to vector<8x32xf32>
    %131 = arith.subf %121, %130 : vector<8x32xf32>
    %132 = arith.mulf %131, %131 : vector<8x32xf32>
    %cst_58 = arith.constant dense<0.000000e+00> : vector<8xf32>
    %133 = vector.multi_reduction <add>, %132, %cst_58 [1] : vector<8x32xf32> to vector<8xf32>
    %134 = vector.shape_cast %133 : vector<8xf32> to vector<8x1xf32>
    %cst_59 = arith.constant 3.200000e+01 : f32
    %135 = vector.broadcast %cst_59 : f32 to vector<8x1xf32>
    %136 = arith.divf %134, %135 : vector<8x1xf32>
    %137 = vector.broadcast %129 : vector<8x1xf32> to vector<8x32xf32>
    %138 = arith.subf %121, %137 : vector<8x32xf32>
    %cst_60 = arith.constant 9.99999974E-6 : f32
    %139 = vector.broadcast %cst_60 : f32 to vector<8x1xf32>
    %140 = arith.addf %136, %139 : vector<8x1xf32>
    %141 = math.rsqrt %140 : vector<8x1xf32>
    %142 = vector.broadcast %141 : vector<8x1xf32> to vector<8x32xf32>
    %143 = arith.mulf %138, %142 : vector<8x32xf32>
    %144 = vector.broadcast %123 : vector<1x32xf32> to vector<8x32xf32>
    %145 = arith.mulf %143, %144 : vector<8x32xf32>
    %146 = vector.broadcast %125 : vector<1x32xf32> to vector<8x32xf32>
    %147 = arith.addf %145, %146 : vector<8x32xf32>
    %c0_61 = arith.constant 0 : index
    %c0_62 = arith.constant 0 : index
    %148 = vector.load %arg17[%c0_61, %c0_62] : memref<8x32xf32, #tpu.memory_space<vmem>>, vector<8x32xf32>
    tpu.vector_store %arg17[%c0_61, %c0_62], %147 {strides = array<i32>} : memref<8x32xf32, #tpu.memory_space<vmem>>, vector<8x32xf32>,
    %c0_63 = arith.constant 0 : index
    %c0_64 = arith.constant 0 : index
    %c0_65 = arith.constant 0 : index
    %149 = vector.load %arg15[%c0_63, %c0_64, %c0_65] : memref<1x8x32xf32, #tpu.memory_space<vmem>>, vector<1x8x32xf32>
    %150 = vector.shape_cast %149 : vector<1x8x32xf32> to vector<8x32xf32>
    %151 = vector.shape_cast %147 : vector<8x32xf32> to vector<1x8x32xf32>
    tpu.vector_store %arg15[%c0_63, %c0_64, %c0_65], %151 {strides = array<i32>} : memref<1x8x32xf32, #tpu.memory_space<vmem>>, vector<1x8x32xf32>,
    return
  }
  func.func @transform_0(%arg0: i32, %arg1: i32) -> (i32, i32, i32) {
    %c0_i32 = arith.constant 0 : i32
    %c0_i32_0 = arith.constant 0 : i32
    %c0_i32_1 = arith.constant 0 : i32
    return %arg0, %c0_i32, %c0_i32_0 : i32, i32, i32
  }
  func.func @transform_1(%arg0: i32, %arg1: i32) -> (i32, i32, i32) {
    %c0_i32 = arith.constant 0 : i32
    %c0_i32_0 = arith.constant 0 : i32
    %c0_i32_1 = arith.constant 0 : i32
    return %arg1, %c0_i32, %c0_i32_0 : i32, i32, i32
  }
  func.func @transform_2(%arg0: i32, %arg1: i32) -> (i32, i32, i32) {
    %c0_i32 = arith.constant 0 : i32
    %c0_i32_0 = arith.constant 0 : i32
    %c0_i32_1 = arith.constant 0 : i32
    return %arg1, %c0_i32, %c0_i32_0 : i32, i32, i32
  }
  func.func @transform_3(%arg0: i32, %arg1: i32) -> (i32, i32, i32) {
    %c0_i32 = arith.constant 0 : i32
    %c0_i32_0 = arith.constant 0 : i32
    %c0_i32_1 = arith.constant 0 : i32
    return %arg1, %c0_i32, %c0_i32_0 : i32, i32, i32
  }
  func.func @transform_4(%arg0: i32, %arg1: i32) -> (i32, i32, i32) {
    %c0_i32 = arith.constant 0 : i32
    %c0_i32_0 = arith.constant 0 : i32
    %c0_i32_1 = arith.constant 0 : i32
    return %arg1, %c0_i32, %c0_i32_0 : i32, i32, i32
  }
  func.func @transform_5(%arg0: i32, %arg1: i32) -> (i32, i32, i32) {
    %c0_i32 = arith.constant 0 : i32
    %c0_i32_0 = arith.constant 0 : i32
    %c0_i32_1 = arith.constant 0 : i32
    return %arg1, %c0_i32, %c0_i32_0 : i32, i32, i32
  }
  func.func @transform_6(%arg0: i32, %arg1: i32) -> (i32, i32, i32) {
    %c0_i32 = arith.constant 0 : i32
    %c0_i32_0 = arith.constant 0 : i32
    %c0_i32_1 = arith.constant 0 : i32
    return %arg1, %c0_i32, %c0_i32_0 : i32, i32, i32
  }
  func.func @transform_7(%arg0: i32, %arg1: i32) -> (i32, i32, i32) {
    %c0_i32 = arith.constant 0 : i32
    %c0_i32_0 = arith.constant 0 : i32
    %c0_i32_1 = arith.constant 0 : i32
    return %arg1, %c0_i32, %c0_i32_0 : i32, i32, i32
  }
  func.func @transform_8(%arg0: i32, %arg1: i32) -> (i32, i32, i32) {
    %c0_i32 = arith.constant 0 : i32
    %c0_i32_0 = arith.constant 0 : i32
    %c0_i32_1 = arith.constant 0 : i32
    return %arg1, %c0_i32, %c0_i32_0 : i32, i32, i32
  }
  func.func @transform_9(%arg0: i32, %arg1: i32) -> (i32, i32, i32) {
    %c0_i32 = arith.constant 0 : i32
    %c0_i32_0 = arith.constant 0 : i32
    %c0_i32_1 = arith.constant 0 : i32
    return %arg1, %c0_i32, %c0_i32_0 : i32, i32, i32
  }
  func.func @transform_10(%arg0: i32, %arg1: i32) -> (i32, i32, i32) {
    %c0_i32 = arith.constant 0 : i32
    %c0_i32_0 = arith.constant 0 : i32
    %c0_i32_1 = arith.constant 0 : i32
    return %arg1, %c0_i32, %c0_i32_0 : i32, i32, i32
  }
  func.func @transform_11(%arg0: i32, %arg1: i32) -> (i32, i32, i32) {
    %c0_i32 = arith.constant 0 : i32
    %c0_i32_0 = arith.constant 0 : i32
    %c0_i32_1 = arith.constant 0 : i32
    return %arg1, %c0_i32, %c0_i32_0 : i32, i32, i32
  }
  func.func @transform_12(%arg0: i32, %arg1: i32) -> (i32, i32, i32) {
    %c0_i32 = arith.constant 0 : i32
    %c0_i32_0 = arith.constant 0 : i32
    %c0_i32_1 = arith.constant 0 : i32
    return %arg1, %c0_i32, %c0_i32_0 : i32, i32, i32
  }
  func.func @transform_13(%arg0: i32, %arg1: i32) -> (i32, i32, i32) {
    %c0_i32 = arith.constant 0 : i32
    %c0_i32_0 = arith.constant 0 : i32
    %c0_i32_1 = arith.constant 0 : i32
    return %arg0, %c0_i32, %c0_i32_0 : i32, i32, i32
  }
  func.func @transform_14(%arg0: i32, %arg1: i32) -> (i32, i32, i32, i32) {
    %c2_i32 = arith.constant 2 : i32
    %0 = arith.muli %arg0, %c2_i32 : i32
    %1 = arith.addi %0, %arg1 : i32
    %c0_i32 = arith.constant 0 : i32
    %c0_i32_0 = arith.constant 0 : i32
    %c0_i32_1 = arith.constant 0 : i32
    %c0_i32_2 = arith.constant 0 : i32
    return %1, %c0_i32, %c0_i32_0, %c0_i32_1 : i32, i32, i32, i32
  }
}

</mosaic_0001>

<llo_original>
// kernel: tpu_custom_call.1
$region0: #{tpu_custom_call.1}
  #allocation0 [shape = 'u32[]', space=smem, size = 0x4, offset = 0x4, fixed_abs, tag = 'smem constant byte address 0x4 - core index']
  #allocation1 [shape = 'u32[144,128]{1,0:T(1,128)}', space=vmem, size = 0x12000, scoped, tag = 'internal scratch']
  #allocation2 [shape = 'f32[8,32]{1,0:T(8,128)}', space=vmem, size = 0x1000, scoped, tag = 'scratch operand']
  %s0 = inlined_call_operand.vmem [shape: f32[2,8,32], index: 0, kind: input, shape index: {}]
  %s1 = inlined_call_operand.vmem [shape: bf16[2,32,96], index: 1, kind: input, shape index: {}]
  %s2 = inlined_call_operand.vmem [shape: f32[2,1,96], index: 2, kind: input, shape index: {}]
  %s3 = inlined_call_operand.vmem [shape: bf16[2,32,32], index: 3, kind: input, shape index: {}]
  %s4 = inlined_call_operand.vmem [shape: f32[2,1,32], index: 4, kind: input, shape index: {}]
  %s5 = inlined_call_operand.vmem [shape: f32[2,1,32], index: 5, kind: input, shape index: {}]
  %s6 = inlined_call_operand.vmem [shape: f32[2,1,32], index: 6, kind: input, shape index: {}]
  %s7 = inlined_call_operand.vmem [shape: bf16[2,32,128], index: 7, kind: input, shape index: {}]
  %s8 = inlined_call_operand.vmem [shape: f32[2,1,128], index: 8, kind: input, shape index: {}]
  %s9 = inlined_call_operand.vmem [shape: bf16[2,128,32], index: 9, kind: input, shape index: {}]
  %s10 = inlined_call_operand.vmem [shape: f32[2,1,32], index: 10, kind: input, shape index: {}]
  %s11 = inlined_call_operand.vmem [shape: f32[2,1,32], index: 11, kind: input, shape index: {}]
  %s12 = inlined_call_operand.vmem [shape: f32[2,1,32], index: 12, kind: input, shape index: {}]
  %s13 = inlined_call_operand.hbm [shape: f32[2,8,32], index: 13, kind: output, shape index: {0}]
  %s14 = inlined_call_operand.hbm [shape: f32[4,4,8,8], index: 14, kind: output, shape index: {1}]
  %15 = xla_tuple %s13, %s14
  %s16 = sld [smem:[#allocation0]]
  $region97: #{tpu_custom_call.1} parent=0
    _
  %s18 = ssub.s32 1, %s16
  %s19 = scalar_select 0, %s18, %s16
  $region1: #{tpu_custom_call.1} parent=0
    #allocation3 [shape = 'u8[8192]{0}', space=vmem, size = 0x2000, scoped, tag = 'output window, operand 0']
    #allocation4 [shape = 's32[2]{0}', space=sflag, size = 0x8, scoped, tag = 'scoped memory for tpu_custom_call.1']
    #allocation5 [shape = 'u8[32768]{0}', space=vmem, size = 0x8000, scoped, tag = 'output window, operand 1']
    #allocation6 [shape = 's32[2]{0}', space=sflag, size = 0x8, scoped, tag = 'scoped memory for tpu_custom_call.1']
    %20 = vsyncpa [#allocation4], 0
    %s21 = scalar_lea.sflag [#allocation4], 1
    %22 = vsyncpa %s21, 0
    %23 = vsyncpa [#allocation6], 0
    %s24 = scalar_lea.sflag [#allocation6], 1
    %25 = vsyncpa %s24, 0
    loop: start=0, step=1, limit=6
    $region2: #{tpu_custom_call.1} parent=1 // loop_pre_header
      _
    $region3: #{tpu_custom_call.1} parent=1 // loop_header
      %s27 = sphi 0, %s31
      %p28 = scmp.ge.s32.totalorder %s27, 6
      %s34 = sphi 0, %s46
      %s35 = sphi 0, %s42
      %s36 = sphi 0, %s34
      %s37 = sphi 0, %s35
      %s38 = sphi 0, %s36
      %s39 = sphi 0, %s37
      %s49 = sphi 0, %s51
      %s52 = sphi 0, %s49
      %s53 = sphi 0, %s52
      %s69 = sphi 0, %s53
      %s75 = sphi 0, %s77
      %s78 = sphi 0, %s75
      %s79 = sphi 0, %s78
      %s95 = sphi 0, %s79
      %s101 = sphi 0, %s103
      %s104 = sphi 0, %s101
      %s105 = sphi 0, %s104
      %s121 = sphi 0, %s105
      %s127 = sphi 0, %s129
      %s130 = sphi 0, %s127
      %s131 = sphi 0, %s130
      %s147 = sphi 0, %s131
      %s153 = sphi 0, %s155
      %s156 = sphi 0, %s153
      %s157 = sphi 0, %s156
      %s173 = sphi 0, %s157
      %s179 = sphi 0, %s181
      %s182 = sphi 0, %s179
      %s183 = sphi 0, %s182
      %s199 = sphi 0, %s183
      %s205 = sphi 0, %s207
      %s208 = sphi 0, %s205
      %s209 = sphi 0, %s208
      %s225 = sphi 0, %s209
      %s231 = sphi 0, %s233
      %s234 = sphi 0, %s231
      %s235 = sphi 0, %s234
      %s251 = sphi 0, %s235
      %s257 = sphi 0, %s259
      %s260 = sphi 0, %s257
      %s261 = sphi 0, %s260
      %s277 = sphi 0, %s261
      %s283 = sphi 0, %s285
      %s286 = sphi 0, %s283
      %s287 = sphi 0, %s286
      %s303 = sphi 0, %s287
      %s309 = sphi 0, %s311
      %s312 = sphi 0, %s309
      %s313 = sphi 0, %s312
      %s329 = sphi 0, %s313
      %s335 = sphi 0, %s337
      %s338 = sphi 0, %s335
      %s339 = sphi 0, %s338
      %s355 = sphi 0, %s339
      %s361 = sphi 0, %s363
      %s364 = sphi 0, %s361
      %s365 = sphi 0, %s364
      %s381 = sphi 0, %s365
      %s387 = sphi 0, %s389
      %s390 = sphi 0, %s387
      %s391 = sphi 0, %s390
      %s407 = sphi 0, %s391
      %s417 = sphi 0, %s419
      %s420 = sphi 0, %s417
      %s421 = sphi 0, %s420
      %s437 = sphi 0, %s421
    $region4: #{tpu_custom_call.1} parent=1 // loop_header_branch
      %30 = sbr.rel (%p28) target = $region8
    $region5: #{tpu_custom_call.1} parent=1 // loop_body
      %s32 = ssub.s32 %s27, 1
      %s33 = ssub.s32 %s27, 2
      %s40 = sadd.s32 1, %s35
      %p41 = scmp.ge.s32.totalorder %s40, 2
      %s42 = scalar_select %p41, 0, %s40
      %s43 = sadd.s32 1, %s34
      %s44 = scalar_select %p41, %s43, %s34
      %p45 = scmp.ge.s32.totalorder %s44, 2
      %s46 = scalar_select %p45, 0, %s44
      %s47 = ssub.s32 %s34, %s46
      %p48 = scmp.eq.s32.totalorder %s47, 0
      %s50 = sadd.s32 %s49, 1
      %s51 = scalar_select %p48, %s49, %s50
      %p54 = pneg %p48
      %p55 = scmp.eq.s32.totalorder %s27, 3
      %p56 = por %p54, %p55
      %p57 = scmp.ne.s32.totalorder %s49, %s52
      %p58 = scmp.eq.s32.totalorder %s27, 0
      %p59 = por %p57, %p58
      %p60 = scmp.ne.s32.totalorder %s49, %s52
      %p61 = scmp.eq.s32.totalorder %s32, 3
      %p62 = por %p60, %p61
      %p63 = scmp.ne.s32.totalorder %s52, %s53
      %p64 = scmp.eq.s32.totalorder %s32, 0
      %p65 = por %p63, %p64
      %p66 = scmp.ne.s32.totalorder %s52, %s53
      %p67 = scmp.eq.s32.totalorder %s33, 3
      %p68 = por %p66, %p67
      %p70 = scmp.ne.s32.totalorder %s53, %s69
      %p71 = scmp.eq.s32.totalorder %s33, 0
      %p72 = por %p70, %p71
      %s73 = ssub.s32 %s35, %s42
      %p74 = scmp.eq.s32.totalorder %s73, 0
      %s76 = sadd.s32 %s75, 1
      %s77 = scalar_select %p74, %s75, %s76
      %p80 = pneg %p74
      %p81 = scmp.eq.s32.totalorder %s27, 3
      %p82 = por %p80, %p81
      %p83 = scmp.ne.s32.totalorder %s75, %s78
      %p84 = scmp.eq.s32.totalorder %s27, 0
      %p85 = por %p83, %p84
      %p86 = scmp.ne.s32.totalorder %s75, %s78
      %p87 = scmp.eq.s32.totalorder %s32, 3
      %p88 = por %p86, %p87
      %p89 = scmp.ne.s32.totalorder %s78, %s79
      %p90 = scmp.eq.s32.totalorder %s32, 0
      %p91 = por %p89, %p90
      %p92 = scmp.ne.s32.totalorder %s78, %s79
      %p93 = scmp.eq.s32.totalorder %s33, 3
      %p94 = por %p92, %p93
      %p96 = scmp.ne.s32.totalorder %s79, %s95
      %p97 = scmp.eq.s32.totalorder %s33, 0
      %p98 = por %p96, %p97
      %s99 = ssub.s32 %s35, %s42
      %p100 = scmp.eq.s32.totalorder %s99, 0
      %s102 = sadd.s32 %s101, 1
      %s103 = scalar_select %p100, %s101, %s102
      %p106 = pneg %p100
      %p107 = scmp.eq.s32.totalorder %s27, 3
      %p108 = por %p106, %p107
      %p109 = scmp.ne.s32.totalorder %s101, %s104
      %p110 = scmp.eq.s32.totalorder %s27, 0
      %p111 = por %p109, %p110
      %p112 = scmp.ne.s32.totalorder %s101, %s104
      %p113 = scmp.eq.s32.totalorder %s32, 3
      %p114 = por %p112, %p113
      %p115 = scmp.ne.s32.totalorder %s104, %s105
      %p116 = scmp.eq.s32.totalorder %s32, 0
      %p117 = por %p115, %p116
      %p118 = scmp.ne.s32.totalorder %s104, %s105
      %p119 = scmp.eq.s32.totalorder %s33, 3
      %p120 = por %p118, %p119
      %p122 = scmp.ne.s32.totalorder %s105, %s121
      %p123 = scmp.eq.s32.totalorder %s33, 0
      %p124 = por %p122, %p123
      %s125 = ssub.s32 %s35, %s42
      %p126 = scmp.eq.s32.totalorder %s125, 0
      %s128 = sadd.s32 %s127, 1
      %s129 = scalar_select %p126, %s127, %s128
      %p132 = pneg %p126
      %p133 = scmp.eq.s32.totalorder %s27, 3
      %p134 = por %p132, %p133
      %p135 = scmp.ne.s32.totalorder %s127, %s130
      %p136 = scmp.eq.s32.totalorder %s27, 0
      %p137 = por %p135, %p136
      %p138 = scmp.ne.s32.totalorder %s127, %s130
      %p139 = scmp.eq.s32.totalorder %s32, 3
      %p140 = por %p138, %p139
      %p141 = scmp.ne.s32.totalorder %s130, %s131
      %p142 = scmp.eq.s32.totalorder %s32, 0
      %p143 = por %p141, %p142
      %p144 = scmp.ne.s32.totalorder %s130, %s131
      %p145 = scmp.eq.s32.totalorder %s33, 3
      %p146 = por %p144, %p145
      %p148 = scmp.ne.s32.totalorder %s131, %s147
      %p149 = scmp.eq.s32.totalorder %s33, 0
      %p150 = por %p148, %p149
      %s151 = ssub.s32 %s35, %s42
      %p152 = scmp.eq.s32.totalorder %s151, 0
      %s154 = sadd.s32 %s153, 1
      %s155 = scalar_select %p152, %s153, %s154
      %p158 = pneg %p152
      %p159 = scmp.eq.s32.totalorder %s27, 3
      %p160 = por %p158, %p159
      %p161 = scmp.ne.s32.totalorder %s153, %s156
      %p162 = scmp.eq.s32.totalorder %s27, 0
      %p163 = por %p161, %p162
      %p164 = scmp.ne.s32.totalorder %s153, %s156
      %p165 = scmp.eq.s32.totalorder %s32, 3
      %p166 = por %p164, %p165
      %p167 = scmp.ne.s32.totalorder %s156, %s157
      %p168 = scmp.eq.s32.totalorder %s32, 0
      %p169 = por %p167, %p168
      %p170 = scmp.ne.s32.totalorder %s156, %s157
      %p171 = scmp.eq.s32.totalorder %s33, 3
      %p172 = por %p170, %p171
      %p174 = scmp.ne.s32.totalorder %s157, %s173
      %p175 = scmp.eq.s32.totalorder %s33, 0
      %p176 = por %p174, %p175
      %s177 = ssub.s32 %s35, %s42
      %p178 = scmp.eq.s32.totalorder %s177, 0
      %s180 = sadd.s32 %s179, 1
      %s181 = scalar_select %p178, %s179, %s180
      %p184 = pneg %p178
      %p185 = scmp.eq.s32.totalorder %s27, 3
      %p186 = por %p184, %p185
      %p187 = scmp.ne.s32.totalorder %s179, %s182
      %p188 = scmp.eq.s32.totalorder %s27, 0
      %p189 = por %p187, %p188
      %p190 = scmp.ne.s32.totalorder %s179, %s182
      %p191 = scmp.eq.s32.totalorder %s32, 3
      %p192 = por %p190, %p191
      %p193 = scmp.ne.s32.totalorder %s182, %s183
      %p194 = scmp.eq.s32.totalorder %s32, 0
      %p195 = por %p193, %p194
      %p196 = scmp.ne.s32.totalorder %s182, %s183
      %p197 = scmp.eq.s32.totalorder %s33, 3
      %p198 = por %p196, %p197
      %p200 = scmp.ne.s32.totalorder %s183, %s199
      %p201 = scmp.eq.s32.totalorder %s33, 0
      %p202 = por %p200, %p201
      %s203 = ssub.s32 %s35, %s42
      %p204 = scmp.eq.s32.totalorder %s203, 0
      %s206 = sadd.s32 %s205, 1
      %s207 = scalar_select %p204, %s205, %s206
      %p210 = pneg %p204
      %p211 = scmp.eq.s32.totalorder %s27, 3
      %p212 = por %p210, %p211
      %p213 = scmp.ne.s32.totalorder %s205, %s208
      %p214 = scmp.eq.s32.totalorder %s27, 0
      %p215 = por %p213, %p214
      %p216 = scmp.ne.s32.totalorder %s205, %s208
      %p217 = scmp.eq.s32.totalorder %s32, 3
      %p218 = por %p216, %p217
      %p219 = scmp.ne.s32.totalorder %s208, %s209
      %p220 = scmp.eq.s32.totalorder %s32, 0
      %p221 = por %p219, %p220
      %p222 = scmp.ne.s32.totalorder %s208, %s209
      %p223 = scmp.eq.s32.totalorder %s33, 3
      %p224 = por %p222, %p223
      %p226 = scmp.ne.s32.totalorder %s209, %s225
      %p227 = scmp.eq.s32.totalorder %s33, 0
      %p228 = por %p226, %p227
      %s229 = ssub.s32 %s35, %s42
      %p230 = scmp.eq.s32.totalorder %s229, 0
      %s232 = sadd.s32 %s231, 1
      %s233 = scalar_select %p230, %s231, %s232
      %p236 = pneg %p230
      %p237 = scmp.eq.s32.totalorder %s27, 3
      %p238 = por %p236, %p237
      %p239 = scmp.ne.s32.totalorder %s231, %s234
      %p240 = scmp.eq.s32.totalorder %s27, 0
      %p241 = por %p239, %p240
      %p242 = scmp.ne.s32.totalorder %s231, %s234
      %p243 = scmp.eq.s32.totalorder %s32, 3
      %p244 = por %p242, %p243
      %p245 = scmp.ne.s32.totalorder %s234, %s235
      %p246 = scmp.eq.s32.totalorder %s32, 0
      %p247 = por %p245, %p246
      %p248 = scmp.ne.s32.totalorder %s234, %s235
      %p249 = scmp.eq.s32.totalorder %s33, 3
      %p250 = por %p248, %p249
      %p252 = scmp.ne.s32.totalorder %s235, %s251
      %p253 = scmp.eq.s32.totalorder %s33, 0
      %p254 = por %p252, %p253
      %s255 = ssub.s32 %s35, %s42
      %p256 = scmp.eq.s32.totalorder %s255, 0
      %s258 = sadd.s32 %s257, 1
      %s259 = scalar_select %p256, %s257, %s258
      %p262 = pneg %p256
      %p263 = scmp.eq.s32.totalorder %s27, 3
      %p264 = por %p262, %p263
      %p265 = scmp.ne.s32.totalorder %s257, %s260
      %p266 = scmp.eq.s32.totalorder %s27, 0
      %p267 = por %p265, %p266
      %p268 = scmp.ne.s32.totalorder %s257, %s260
      %p269 = scmp.eq.s32.totalorder %s32, 3
      %p270 = por %p268, %p269
      %p271 = scmp.ne.s32.totalorder %s260, %s261
      %p272 = scmp.eq.s32.totalorder %s32, 0
      %p273 = por %p271, %p272
      %p274 = scmp.ne.s32.totalorder %s260, %s261
      %p275 = scmp.eq.s32.totalorder %s33, 3
      %p276 = por %p274, %p275
      %p278 = scmp.ne.s32.totalorder %s261, %s277
      %p279 = scmp.eq.s32.totalorder %s33, 0
      %p280 = por %p278, %p279
      %s281 = ssub.s32 %s35, %s42
      %p282 = scmp.eq.s32.totalorder %s281, 0
      %s284 = sadd.s32 %s283, 1
      %s285 = scalar_select %p282, %s283, %s284
      %p288 = pneg %p282
      %p289 = scmp.eq.s32.totalorder %s27, 3
      %p290 = por %p288, %p289
      %p291 = scmp.ne.s32.totalorder %s283, %s286
      %p292 = scmp.eq.s32.totalorder %s27, 0
      %p293 = por %p291, %p292
      %p294 = scmp.ne.s32.totalorder %s283, %s286
      %p295 = scmp.eq.s32.totalorder %s32, 3
      %p296 = por %p294, %p295
      %p297 = scmp.ne.s32.totalorder %s286, %s287
      %p298 = scmp.eq.s32.totalorder %s32, 0
      %p299 = por %p297, %p298
      %p300 = scmp.ne.s32.totalorder %s286, %s287
      %p301 = scmp.eq.s32.totalorder %s33, 3
      %p302 = por %p300, %p301
      %p304 = scmp.ne.s32.totalorder %s287, %s303
      %p305 = scmp.eq.s32.totalorder %s33, 0
      %p306 = por %p304, %p305
      %s307 = ssub.s32 %s35, %s42
      %p308 = scmp.eq.s32.totalorder %s307, 0
      %s310 = sadd.s32 %s309, 1
      %s311 = scalar_select %p308, %s309, %s310
      %p314 = pneg %p308
      %p315 = scmp.eq.s32.totalorder %s27, 3
      %p316 = por %p314, %p315
      %p317 = scmp.ne.s32.totalorder %s309, %s312
      %p318 = scmp.eq.s32.totalorder %s27, 0
      %p319 = por %p317, %p318
      %p320 = scmp.ne.s32.totalorder %s309, %s312
      %p321 = scmp.eq.s32.totalorder %s32, 3
      %p322 = por %p320, %p321
      %p323 = scmp.ne.s32.totalorder %s312, %s313
      %p324 = scmp.eq.s32.totalorder %s32, 0
      %p325 = por %p323, %p324
      %p326 = scmp.ne.s32.totalorder %s312, %s313
      %p327 = scmp.eq.s32.totalorder %s33, 3
      %p328 = por %p326, %p327
      %p330 = scmp.ne.s32.totalorder %s313, %s329
      %p331 = scmp.eq.s32.totalorder %s33, 0
      %p332 = por %p330, %p331
      %s333 = ssub.s32 %s35, %s42
      %p334 = scmp.eq.s32.totalorder %s333, 0
      %s336 = sadd.s32 %s335, 1
      %s337 = scalar_select %p334, %s335, %s336
      %p340 = pneg %p334
      %p341 = scmp.eq.s32.totalorder %s27, 3
      %p342 = por %p340, %p341
      %p343 = scmp.ne.s32.totalorder %s335, %s338
      %p344 = scmp.eq.s32.totalorder %s27, 0
      %p345 = por %p343, %p344
      %p346 = scmp.ne.s32.totalorder %s335, %s338
      %p347 = scmp.eq.s32.totalorder %s32, 3
      %p348 = por %p346, %p347
      %p349 = scmp.ne.s32.totalorder %s338, %s339
      %p350 = scmp.eq.s32.totalorder %s32, 0
      %p351 = por %p349, %p350
      %p352 = scmp.ne.s32.totalorder %s338, %s339
      %p353 = scmp.eq.s32.totalorder %s33, 3
      %p354 = por %p352, %p353
      %p356 = scmp.ne.s32.totalorder %s339, %s355
      %p357 = scmp.eq.s32.totalorder %s33, 0
      %p358 = por %p356, %p357
      %s359 = ssub.s32 %s35, %s42
      %p360 = scmp.eq.s32.totalorder %s359, 0
      %s362 = sadd.s32 %s361, 1
      %s363 = scalar_select %p360, %s361, %s362
      %p366 = pneg %p360
      %p367 = scmp.eq.s32.totalorder %s27, 3
      %p368 = por %p366, %p367
      %p369 = scmp.ne.s32.totalorder %s361, %s364
      %p370 = scmp.eq.s32.totalorder %s27, 0
      %p371 = por %p369, %p370
      %p372 = scmp.ne.s32.totalorder %s361, %s364
      %p373 = scmp.eq.s32.totalorder %s32, 3
      %p374 = por %p372, %p373
      %p375 = scmp.ne.s32.totalorder %s364, %s365
      %p376 = scmp.eq.s32.totalorder %s32, 0
      %p377 = por %p375, %p376
      %p378 = scmp.ne.s32.totalorder %s364, %s365
      %p379 = scmp.eq.s32.totalorder %s33, 3
      %p380 = por %p378, %p379
      %p382 = scmp.ne.s32.totalorder %s365, %s381
      %p383 = scmp.eq.s32.totalorder %s33, 0
      %p384 = por %p382, %p383
      %s385 = ssub.s32 %s34, %s46
      %p386 = scmp.eq.s32.totalorder %s385, 0
      %s388 = sadd.s32 %s387, 1
      %s389 = scalar_select %p386, %s387, %s388
      %p392 = pneg %p386
      %p393 = scmp.eq.s32.totalorder %s27, 3
      %p394 = por %p392, %p393
      %p395 = scmp.ne.s32.totalorder %s387, %s390
      %p396 = scmp.eq.s32.totalorder %s27, 0
      %p397 = por %p395, %p396
      %p398 = scmp.ne.s32.totalorder %s387, %s390
      %p399 = scmp.eq.s32.totalorder %s32, 3
      %p400 = por %p398, %p399
      %p401 = scmp.ne.s32.totalorder %s390, %s391
      %p402 = scmp.eq.s32.totalorder %s32, 0
      %p403 = por %p401, %p402
      %p404 = scmp.ne.s32.totalorder %s390, %s391
      %p405 = scmp.eq.s32.totalorder %s33, 3
      %p406 = por %p404, %p405
      %p408 = scmp.ne.s32.totalorder %s391, %s407
      %p409 = scmp.eq.s32.totalorder %s33, 0
      %p410 = por %p408, %p409
      %s411 = smul.u32 %s34, 2
      %s412 = sadd.s32 %s411, %s35
      %s413 = smul.u32 %s46, 2
      %s414 = sadd.s32 %s413, %s42
      %s415 = ssub.s32 %s412, %s414
      %p416 = scmp.eq.s32.totalorder %s415, 0
      %s418 = sadd.s32 %s417, 1
      %s419 = scalar_select %p416, %s417, %s418
      %p422 = pneg %p416
      %p423 = scmp.eq.s32.totalorder %s27, 3
      %p424 = por %p422, %p423
      %p425 = scmp.ne.s32.totalorder %s417, %s420
      %p426 = scmp.eq.s32.totalorder %s27, 0
      %p427 = por %p425, %p426
      %p428 = scmp.ne.s32.totalorder %s417, %s420
      %p429 = scmp.eq.s32.totalorder %s32, 3
      %p430 = por %p428, %p429
      %p431 = scmp.ne.s32.totalorder %s420, %s421
      %p432 = scmp.eq.s32.totalorder %s32, 0
      %p433 = por %p431, %p432
      %p434 = scmp.ne.s32.totalorder %s420, %s421
      %p435 = scmp.eq.s32.totalorder %s33, 3
      %p436 = por %p434, %p435
      %p438 = scmp.ne.s32.totalorder %s421, %s437
      %p439 = scmp.eq.s32.totalorder %s33, 0
      %p440 = por %p438, %p439
      %p441 = scmp.le.s32.totalorder 1, %s27
      %p442 = scmp.lt.s32.totalorder %s27, 5
      %p443 = pnand %p441, %p442
      %p444 = pneg %p443
      // Predicated region
      $region9: #{tpu_custom_call.1} parent=5 // pred_check
        _
      $region10: #{tpu_custom_call.1} parent=5 // pred_check_branch
        %446 = sbr.rel (%p443) target = $region12
      $region11: #{tpu_custom_call.1} parent=5 // pred_region
        %s447 = ssub.s32 %s27, 1
      $region12: #{tpu_custom_call.1} parent=5 // pred_fallthru
        _
      %p448 = scmp.lt.s32.totalorder %s27, 4
      // Predicated region
      $region13: #{tpu_custom_call.1} parent=5 // pred_check
        %p449 = pneg %p448
      $region14: #{tpu_custom_call.1} parent=5 // pred_check_branch
        %451 = sbr.rel (%p449) target = $region16
      $region15: #{tpu_custom_call.1} parent=5 // pred_region
        // Predicated region
        $region17: #{tpu_custom_call.1} parent=15 // pred_check
          %p452 = pneg %p59
        $region18: #{tpu_custom_call.1} parent=15 // pred_check_branch
          %454 = sbr.rel (%p452) target = $region20
        $region19: #{tpu_custom_call.1} parent=15 // pred_region
          %p455 = scmp.lt.s32.totalorder %s34, 1
          %s456 = scalar_select %p455, %s34, 1
          %s457 = smul.addr %s456, 8
          %s458 = scalar_lea.vmem %s0, %s457
        $region20: #{tpu_custom_call.1} parent=15 // pred_fallthru
          _
        // Predicated region
        $region21: #{tpu_custom_call.1} parent=15 // pred_check
          %p459 = pneg %p85
        $region22: #{tpu_custom_call.1} parent=15 // pred_check_branch
          %461 = sbr.rel (%p459) target = $region24
        $region23: #{tpu_custom_call.1} parent=15 // pred_region
          %p462 = scmp.lt.s32.totalorder %s35, 1
          %s463 = scalar_select %p462, %s35, 1
          %s464 = smul.addr %s463, 4
          %s465 = smul.addr %s464, 4
          %s466 = scalar_lea.vmem %s1, %s465
        $region24: #{tpu_custom_call.1} parent=15 // pred_fallthru
          _
        // Predicated region
        $region25: #{tpu_custom_call.1} parent=15 // pred_check
          %p467 = pneg %p111
        $region26: #{tpu_custom_call.1} parent=15 // pred_check_branch
          %469 = sbr.rel (%p467) target = $region28
        $region27: #{tpu_custom_call.1} parent=15 // pred_region
          %p470 = scmp.lt.s32.totalorder %s35, 1
          %s471 = scalar_select %p470, %s35, 1
          %s472 = scalar_lea.vmem %s2, %s471
        $region28: #{tpu_custom_call.1} parent=15 // pred_fallthru
          _
        // Predicated region
        $region29: #{tpu_custom_call.1} parent=15 // pred_check
          %p473 = pneg %p137
        $region30: #{tpu_custom_call.1} parent=15 // pred_check_branch
          %475 = sbr.rel (%p473) target = $region32
        $region31: #{tpu_custom_call.1} parent=15 // pred_region
          %p476 = scmp.lt.s32.totalorder %s35, 1
          %s477 = scalar_select %p476, %s35, 1
          %s478 = smul.addr %s477, 4
          %s479 = smul.addr %s478, 4
          %s480 = scalar_lea.vmem %s3, %s479
        $region32: #{tpu_custom_call.1} parent=15 // pred_fallthru
          _
        // Predicated region
        $region33: #{tpu_custom_call.1} parent=15 // pred_check
          %p481 = pneg %p163
        $region34: #{tpu_custom_call.1} parent=15 // pred_check_branch
          %483 = sbr.rel (%p481) target = $region36
        $region35: #{tpu_custom_call.1} parent=15 // pred_region
          %p484 = scmp.lt.s32.totalorder %s35, 1
          %s485 = scalar_select %p484, %s35, 1
          %s486 = scalar_lea.vmem %s4, %s485
        $region36: #{tpu_custom_call.1} parent=15 // pred_fallthru
          _
        // Predicated region
        $region37: #{tpu_custom_call.1} parent=15 // pred_check
          %p487 = pneg %p189
        $region38: #{tpu_custom_call.1} parent=15 // pred_check_branch
          %489 = sbr.rel (%p487) target = $region40
        $region39: #{tpu_custom_call.1} parent=15 // pred_region
          %p490 = scmp.lt.s32.totalorder %s35, 1
          %s491 = scalar_select %p490, %s35, 1
          %s492 = scalar_lea.vmem %s5, %s491
        $region40: #{tpu_custom_call.1} parent=15 // pred_fallthru
          _
        // Predicated region
        $region41: #{tpu_custom_call.1} parent=15 // pred_check
          %p493 = pneg %p215
        $region42: #{tpu_custom_call.1} parent=15 // pred_check_branch
          %495 = sbr.rel (%p493) target = $region44
        $region43: #{tpu_custom_call.1} parent=15 // pred_region
          %p496 = scmp.lt.s32.totalorder %s35, 1
          %s497 = scalar_select %p496, %s35, 1
          %s498 = scalar_lea.vmem %s6, %s497
        $region44: #{tpu_custom_call.1} parent=15 // pred_fallthru
          _
        // Predicated region
        $region45: #{tpu_custom_call.1} parent=15 // pred_check
          %p499 = pneg %p241
        $region46: #{tpu_custom_call.1} parent=15 // pred_check_branch
          %501 = sbr.rel (%p499) target = $region48
        $region47: #{tpu_custom_call.1} parent=15 // pred_region
          %p502 = scmp.lt.s32.totalorder %s35, 1
          %s503 = scalar_select %p502, %s35, 1
          %s504 = smul.addr %s503, 4
          %s505 = smul.addr %s504, 4
          %s506 = scalar_lea.vmem %s7, %s505
        $region48: #{tpu_custom_call.1} parent=15 // pred_fallthru
          _
        // Predicated region
        $region49: #{tpu_custom_call.1} parent=15 // pred_check
          %p507 = pneg %p267
        $region50: #{tpu_custom_call.1} parent=15 // pred_check_branch
          %509 = sbr.rel (%p507) target = $region52
        $region51: #{tpu_custom_call.1} parent=15 // pred_region
          %p510 = scmp.lt.s32.totalorder %s35, 1
          %s511 = scalar_select %p510, %s35, 1
          %s512 = scalar_lea.vmem %s8, %s511
        $region52: #{tpu_custom_call.1} parent=15 // pred_fallthru
          _
        // Predicated region
        $region53: #{tpu_custom_call.1} parent=15 // pred_check
          %p513 = pneg %p293
        $region54: #{tpu_custom_call.1} parent=15 // pred_check_branch
          %515 = sbr.rel (%p513) target = $region56
        $region55: #{tpu_custom_call.1} parent=15 // pred_region
          %p516 = scmp.lt.s32.totalorder %s35, 1
          %s517 = scalar_select %p516, %s35, 1
          %s518 = smul.addr %s517, 16
          %s519 = smul.addr %s518, 4
          %s520 = scalar_lea.vmem %s9, %s519
        $region56: #{tpu_custom_call.1} parent=15 // pred_fallthru
          _
        // Predicated region
        $region57: #{tpu_custom_call.1} parent=15 // pred_check
          %p521 = pneg %p319
        $region58: #{tpu_custom_call.1} parent=15 // pred_check_branch
          %523 = sbr.rel (%p521) target = $region60
        $region59: #{tpu_custom_call.1} parent=15 // pred_region
          %p524 = scmp.lt.s32.totalorder %s35, 1
          %s525 = scalar_select %p524, %s35, 1
          %s526 = scalar_lea.vmem %s10, %s525
        $region60: #{tpu_custom_call.1} parent=15 // pred_fallthru
          _
        // Predicated region
        $region61: #{tpu_custom_call.1} parent=15 // pred_check
          %p527 = pneg %p345
        $region62: #{tpu_custom_call.1} parent=15 // pred_check_branch
          %529 = sbr.rel (%p527) target = $region64
        $region63: #{tpu_custom_call.1} parent=15 // pred_region
          %p530 = scmp.lt.s32.totalorder %s35, 1
          %s531 = scalar_select %p530, %s35, 1
          %s532 = scalar_lea.vmem %s11, %s531
        $region64: #{tpu_custom_call.1} parent=15 // pred_fallthru
          _
        // Predicated region
        $region65: #{tpu_custom_call.1} parent=15 // pred_check
          %p533 = pneg %p371
        $region66: #{tpu_custom_call.1} parent=15 // pred_check_branch
          %535 = sbr.rel (%p533) target = $region68
        $region67: #{tpu_custom_call.1} parent=15 // pred_region
          %p536 = scmp.lt.s32.totalorder %s35, 1
          %s537 = scalar_select %p536, %s35, 1
          %s538 = scalar_lea.vmem %s12, %s537
        $region68: #{tpu_custom_call.1} parent=15 // pred_fallthru
          _
      $region16: #{tpu_custom_call.1} parent=5 // pred_fallthru
        _
      %p539 = scmp.le.s32.totalorder 1, %s27
      %p540 = scmp.lt.s32.totalorder %s27, 5
      %p541 = pnand %p539, %p540
      %p542 = pneg %p541
      // Predicated region
      $region69: #{tpu_custom_call.1} parent=5 // pred_check
        _
      $region70: #{tpu_custom_call.1} parent=5 // pred_check_branch
        %544 = sbr.rel (%p541) target = $region72
      $region71: #{tpu_custom_call.1} parent=5 // pred_region
        %s545 = ssub.s32 %s27, 1
        %p546 = scmp.lt.s32.totalorder %s36, 1
        %s547 = scalar_select %p546, %s36, 1
        %s548 = smul.addr %s547, 8
        %s549 = scalar_lea.vmem %s0, %s548
        %p550 = pneg %p65
        %p551 = pneg %p62
        %p552 = scmp.lt.s32.totalorder %s37, 1
        %s553 = scalar_select %p552, %s37, 1
        %s554 = smul.addr %s553, 4
        %s555 = smul.addr %s554, 4
        %s556 = scalar_lea.vmem %s1, %s555
        %p557 = pneg %p91
        %p558 = pneg %p88
        %p559 = scmp.lt.s32.totalorder %s37, 1
        %s560 = scalar_select %p559, %s37, 1
        %s561 = scalar_lea.vmem %s2, %s560
        %p562 = pneg %p117
        %p563 = pneg %p114
        %p564 = scmp.lt.s32.totalorder %s37, 1
        %s565 = scalar_select %p564, %s37, 1
        %s566 = smul.addr %s565, 4
        %s567 = smul.addr %s566, 4
        %s568 = scalar_lea.vmem %s3, %s567
        %p569 = pneg %p143
        %p570 = pneg %p140
        %p571 = scmp.lt.s32.totalorder %s37, 1
        %s572 = scalar_select %p571, %s37, 1
        %s573 = scalar_lea.vmem %s4, %s572
        %p574 = pneg %p169
        %p575 = pneg %p166
        %p576 = scmp.lt.s32.totalorder %s37, 1
        %s577 = scalar_select %p576, %s37, 1
        %s578 = scalar_lea.vmem %s5, %s577
        %p579 = pneg %p195
        %p580 = pneg %p192
        %p581 = scmp.lt.s32.totalorder %s37, 1
        %s582 = scalar_select %p581, %s37, 1
        %s583 = scalar_lea.vmem %s6, %s582
        %p584 = pneg %p221
        %p585 = pneg %p218
        %p586 = scmp.lt.s32.totalorder %s37, 1
        %s587 = scalar_select %p586, %s37, 1
        %s588 = smul.addr %s587, 4
        %s589 = smul.addr %s588, 4
        %s590 = scalar_lea.vmem %s7, %s589
        %p591 = pneg %p247
        %p592 = pneg %p244
        %p593 = scmp.lt.s32.totalorder %s37, 1
        %s594 = scalar_select %p593, %s37, 1
        %s595 = scalar_lea.vmem %s8, %s594
        %p596 = pneg %p273
        %p597 = pneg %p270
        %p598 = scmp.lt.s32.totalorder %s37, 1
        %s599 = scalar_select %p598, %s37, 1
        %s600 = smul.addr %s599, 16
        %s601 = smul.addr %s600, 4
        %s602 = scalar_lea.vmem %s9, %s601
        %p603 = pneg %p299
        %p604 = pneg %p296
        %p605 = scmp.lt.s32.totalorder %s37, 1
        %s606 = scalar_select %p605, %s37, 1
        %s607 = scalar_lea.vmem %s10, %s606
        %p608 = pneg %p325
        %p609 = pneg %p322
        %p610 = scmp.lt.s32.totalorder %s37, 1
        %s611 = scalar_select %p610, %s37, 1
        %s612 = scalar_lea.vmem %s11, %s611
        %p613 = pneg %p351
        %p614 = pneg %p348
        %p615 = scmp.lt.s32.totalorder %s37, 1
        %s616 = scalar_select %p615, %s37, 1
        %s617 = scalar_lea.vmem %s12, %s616
        %p618 = pneg %p377
        %p619 = pneg %p374
        %p620 = pneg %p403
        %p621 = pneg %p400
        %s622 = sand.u32 %s390, 1
        %s623 = scalar_lea.sflag [#allocation4], %s622
        %s624 = sand.u32 %s390, 1
        %s625 = smul.addr %s624, 8
        %s626 = scalar_lea.vmem [#allocation3], %s625
        %p627 = pneg %p433
        %p628 = pneg %p430
        %s629 = sand.u32 %s420, 1
        %s630 = scalar_lea.sflag [#allocation6], %s629
        %s631 = sand.u32 %s420, 1
        %s632 = smul.addr %s631, 32
        %s633 = scalar_lea.vmem [#allocation5], %s632
        %p634 = scmp.lt.s32.totalorder %s36, 1
        %s635 = scalar_select %p634, %s36, 1
        %s636 = smul.addr %s635, 8
        %s637 = scalar_lea.vmem %s0, %s636
        %p638 = scmp.lt.s32.totalorder %s37, 1
        %s639 = scalar_select %p638, %s37, 1
        %s640 = smul.addr %s639, 4
        %s641 = smul.addr %s640, 4
        %s642 = scalar_lea.vmem %s1, %s641
        %p643 = scmp.lt.s32.totalorder %s37, 1
        %s644 = scalar_select %p643, %s37, 1
        %s645 = scalar_lea.vmem %s2, %s644
        %p646 = scmp.lt.s32.totalorder %s37, 1
        %s647 = scalar_select %p646, %s37, 1
        %s648 = smul.addr %s647, 4
        %s649 = smul.addr %s648, 4
        %s650 = scalar_lea.vmem %s3, %s649
        %p651 = scmp.lt.s32.totalorder %s37, 1
        %s652 = scalar_select %p651, %s37, 1
        %s653 = scalar_lea.vmem %s4, %s652
        %p654 = scmp.lt.s32.totalorder %s37, 1
        %s655 = scalar_select %p654, %s37, 1
        %s656 = scalar_lea.vmem %s5, %s655
        %p657 = scmp.lt.s32.totalorder %s37, 1
        %s658 = scalar_select %p657, %s37, 1
        %s659 = scalar_lea.vmem %s6, %s658
        %p660 = scmp.lt.s32.totalorder %s37, 1
        %s661 = scalar_select %p660, %s37, 1
        %s662 = smul.addr %s661, 4
        %s663 = smul.addr %s662, 4
        %s664 = scalar_lea.vmem %s7, %s663
        %p665 = scmp.lt.s32.totalorder %s37, 1
        %s666 = scalar_select %p665, %s37, 1
        %s667 = scalar_lea.vmem %s8, %s666
        %p668 = scmp.lt.s32.totalorder %s37, 1
        %s669 = scalar_select %p668, %s37, 1
        %s670 = smul.addr %s669, 16
        %s671 = smul.addr %s670, 4
        %s672 = scalar_lea.vmem %s9, %s671
        %p673 = scmp.lt.s32.totalorder %s37, 1
        %s674 = scalar_select %p673, %s37, 1
        %s675 = scalar_lea.vmem %s10, %s674
        %p676 = scmp.lt.s32.totalorder %s37, 1
        %s677 = scalar_select %p676, %s37, 1
        %s678 = scalar_lea.vmem %s11, %s677
        %p679 = scmp.lt.s32.totalorder %s37, 1
        %s680 = scalar_select %p679, %s37, 1
        %s681 = scalar_lea.vmem %s12, %s680
        %s682 = smul.u32 %s36, 2
        %s683 = sadd.s32 %s682, %s37
        %p685 = scmp.eq.s32.totalorder %s37, 0
        // Predicated region
        $region73: #{tpu_custom_call.1} parent=71 // pred_check
          %p686 = pneg %p685
        $region74: #{tpu_custom_call.1} parent=71 // pred_check_branch
          %688 = sbr.rel (%p686) target = $region76
        $region75: #{tpu_custom_call.1} parent=71 // pred_region
          %v689 = vld [vmem:[%s637] sm:$0xff]
          %vm690 = vcmask 261120
          %691 = vst.msk [vmem:[#allocation2] sm:$0xff] %vm690, %v689
        $region76: #{tpu_custom_call.1} parent=71 // pred_fallthru
          _
        %v692 = vld [vmem:[#allocation2] sm:$0xff]
        %v693 = vpack.c.bf16 %v692, %v692
        %v694 = vld [vmem:[%s642] sm:$0xf]
        %v695 = vld [vmem:[%s642 + $0x4] sm:$0xf]
        %v696 = vld [vmem:[%s642 + $0x8] sm:$0xf]
        %v697 = vld [vmem:[%s642 + $0xc] sm:$0xf]
        %v698 = vld [vmem:[%s645] sm:$0x1]
        %v700 = vlaneseq
        %v701 = vshrl.u32 %v700, 7
        %v702 = vsub.s32 0, %v701
        %v703 = vrot.slane %v698, %v702
        %v709 = vunpack.c.l.b16 %v694
        %v710 = vunpack.c.l.b16 %v695
        %v711 = vunpack.c.l.b16 %v696
        %v712 = vunpack.c.l.b16 %v697
        %v713 = vpack.c.b16 %v710, %v709
        %v714 = vpack.c.b16 %v712, %v711
        %vm717 = vcmask 261120
        %v719 = vsel %vm717, %v693, 0
        %721 = vmatprep.subr.bf16.mxu0 0
        %722 = vmatpush1.bf16.msra.mxu0 0
        %723 = vmatprep.subr.bf16.mxu0 0
        %724 = vmatpush1.bf16.msra.mxu0 0
        %725 = vmatprep.subr.bf16.mxu0 0
        %726 = vmatpush1.bf16.msra.mxu0 0
        %727 = vmatprep.subr.bf16.mxu0 0
        %728 = vmatpush1.bf16.msra.mxu0 0
        %729 = vmatprep.subr.bf16.mxu0 0
        %730 = vmatpush1.bf16.msra.mxu0 0
        %731 = vmatprep.subr.bf16.mxu0 0
        %732 = vmatpush1.bf16.msra.mxu0 0
        %733 = vmatprep.subr.bf16.mxu0 0
        %734 = vmatpush1.bf16.msra.mxu0 %v714
        %735 = vmatprep.subr.bf16.mxu0 0
        %736 = vmatpush1.bf16.msra.mxu0 %v713
        %737 = vmatprep.subr.bf16.mxu0 0
        %738 = vmatpush2.bf16.msra.mxu0 0
        %739 = vmatprep.subr.bf16.mxu0 0
        %740 = vmatpush2.bf16.msra.mxu0 0
        %741 = vmatprep.subr.bf16.mxu0 0
        %742 = vmatpush2.bf16.msra.mxu0 0
        %743 = vmatprep.subr.bf16.mxu0 0
        %744 = vmatpush2.bf16.msra.mxu0 0
        %745 = vmatprep.subr.bf16.mxu0 0
        %746 = vmatpush2.bf16.msra.mxu0 0
        %747 = vmatprep.subr.bf16.mxu0 0
        %748 = vmatpush2.bf16.msra.mxu0 0
        %749 = vmatprep.subr.bf16.mxu0 0
        %750 = vmatpush2.bf16.msra.mxu0 0
        %751 = vmatprep.subr.bf16.mxu0 0
        %752 = vmatpush2.bf16.msra.mxu0 0
        %753 = vmatprep.mubr.bf16.mxu0 0
        %754 = vmatmul.mubr.bf16.gmra.mxu0 %v719
        %v755 = vpop.f32.mrf.mxu0
        %v756 = vadd.f32 %v703, %v755
        %v757 = vpop.f32.mrf.mxu0
        %v758 = vpop.f32.mrf.mxu0
        %v759 = vpop.f32.mrf.mxu0
        %760 = vdwg.mxu0
        %762 = vrot.lane.b32.xlu0 %v756, 120
        %v763 = vpop.permute.xlu0 %762
        %765 = vrot.lane.b32.xlu0 %v756, 112
        %v766 = vpop.permute.xlu0 %765
        %768 = vrot.lane.b32.xlu0 %v756, 104
        %v769 = vpop.permute.xlu0 %768
        %v771 = vmul.f32 %v756, 0.35355338
        %v772 = vmul.f32 %v763, 0.35355338
        %v773 = vmul.f32 %v766, 0.35355338
        %v774 = vmul.f32 %v769, 0.35355338
        %v775 = vpack.c.bf16 %v771, %v771
        %v776 = vpack.c.bf16 %v772, %v772
        %v777 = vpack.c.bf16 %v773, %v773
        %v778 = vpack.c.bf16 %v774, %v774
        %v779 = vpack.c.bf16 %v756, %v756
        %v780 = vpack.c.bf16 %v763, %v763
        %v781 = vpack.c.bf16 %v766, %v766
        %v782 = vpack.c.bf16 %v769, %v769
        %784 = vrot.lane.b32.xlu0 %v779, 96
        %v785 = vpop.permute.xlu0 %784
        %vm786 = vcmask 64512
        %v788 = vsel %vm786, %v775, 0
        %v791 = vsel %vm786, %v785, 0
        %793 = vmatprep.subr.bf16.mxu0 0
        %794 = vmatpush1.bf16.xpose.msra.mxu0 0
        %795 = vmatprep.subr.bf16.mxu0 0
        %796 = vmatpush1.bf16.xpose.msra.mxu0 0
        %797 = vmatprep.subr.bf16.mxu0 0
        %798 = vmatpush1.bf16.xpose.msra.mxu0 0
        %799 = vmatprep.subr.bf16.mxu0 0
        %800 = vmatpush1.bf16.xpose.msra.mxu0 0
        %801 = vmatprep.subr.bf16.mxu0 0
        %802 = vmatpush1.bf16.xpose.msra.mxu0 0
        %803 = vmatprep.subr.bf16.mxu0 0
        %804 = vmatpush1.bf16.xpose.msra.mxu0 0
        %805 = vmatprep.subr.bf16.mxu0 0
        %806 = vmatpush1.bf16.xpose.msra.mxu0 0
        %807 = vmatprep.subr.bf16.mxu0 0
        %808 = vmatpush1.bf16.xpose.msra.mxu0 %v791
        %809 = vmatprep.subr.bf16.mxu0 0
        %810 = vmatpush2.bf16.xpose.msra.mxu0 0
        %811 = vmatprep.subr.bf16.mxu0 0
        %812 = vmatpush2.bf16.xpose.msra.mxu0 0
        %813 = vmatprep.subr.bf16.mxu0 0
        %814 = vmatpush2.bf16.xpose.msra.mxu0 0
        %815 = vmatprep.subr.bf16.mxu0 0
        %816 = vmatpush2.bf16.xpose.msra.mxu0 0
        %817 = vmatprep.subr.bf16.mxu0 0
        %818 = vmatpush2.bf16.xpose.msra.mxu0 0
        %819 = vmatprep.subr.bf16.mxu0 0
        %820 = vmatpush2.bf16.xpose.msra.mxu0 0
        %821 = vmatprep.subr.bf16.mxu0 0
        %822 = vmatpush2.bf16.xpose.msra.mxu0 0
        %823 = vmatprep.subr.bf16.mxu0 0
        %824 = vmatpush2.bf16.xpose.msra.mxu0 0
        %825 = vmatprep.mubr.bf16.mxu0 0
        %826 = vmatmul.mubr.bf16.gmra.mxu0 %v788
        %v827 = vpop.f32.mrf.mxu0
        %v828 = vadd.f32 0.0, %v827
        %v829 = vpop.f32.mrf.mxu0
        %v830 = vpop.f32.mrf.mxu0
        %v831 = vpop.f32.mrf.mxu0
        %832 = vdwg.mxu0
        %834 = vrot.lane.b32.xlu0 %v780, 96
        %v835 = vpop.permute.xlu0 %834
        %v837 = vsel %vm786, %v776, 0
        %v840 = vsel %vm786, %v835, 0
        %842 = vmatprep.subr.bf16.mxu0 0
        %843 = vmatpush1.bf16.xpose.msra.mxu0 0
        %844 = vmatprep.subr.bf16.mxu0 0
        %845 = vmatpush1.bf16.xpose.msra.mxu0 0
        %846 = vmatprep.subr.bf16.mxu0 0
        %847 = vmatpush1.bf16.xpose.msra.mxu0 0
        %848 = vmatprep.subr.bf16.mxu0 0
        %849 = vmatpush1.bf16.xpose.msra.mxu0 0
        %850 = vmatprep.subr.bf16.mxu0 0
        %851 = vmatpush1.bf16.xpose.msra.mxu0 0
        %852 = vmatprep.subr.bf16.mxu0 0
        %853 = vmatpush1.bf16.xpose.msra.mxu0 0
        %854 = vmatprep.subr.bf16.mxu0 0
        %855 = vmatpush1.bf16.xpose.msra.mxu0 0
        %856 = vmatprep.subr.bf16.mxu0 0
        %857 = vmatpush1.bf16.xpose.msra.mxu0 %v840
        %858 = vmatprep.subr.bf16.mxu0 0
        %859 = vmatpush2.bf16.xpose.msra.mxu0 0
        %860 = vmatprep.subr.bf16.mxu0 0
        %861 = vmatpush2.bf16.xpose.msra.mxu0 0
        %862 = vmatprep.subr.bf16.mxu0 0
        %863 = vmatpush2.bf16.xpose.msra.mxu0 0
        %864 = vmatprep.subr.bf16.mxu0 0
        %865 = vmatpush2.bf16.xpose.msra.mxu0 0
        %866 = vmatprep.subr.bf16.mxu0 0
        %867 = vmatpush2.bf16.xpose.msra.mxu0 0
        %868 = vmatprep.subr.bf16.mxu0 0
        %869 = vmatpush2.bf16.xpose.msra.mxu0 0
        %870 = vmatprep.subr.bf16.mxu0 0
        %871 = vmatpush2.bf16.xpose.msra.mxu0 0
        %872 = vmatprep.subr.bf16.mxu0 0
        %873 = vmatpush2.bf16.xpose.msra.mxu0 0
        %874 = vmatprep.mubr.bf16.mxu0 0
        %875 = vmatmul.mubr.bf16.gmra.mxu0 %v837
        %v876 = vpop.f32.mrf.mxu0
        %v877 = vadd.f32 0.0, %v876
        %v878 = vpop.f32.mrf.mxu0
        %v879 = vpop.f32.mrf.mxu0
        %v880 = vpop.f32.mrf.mxu0
        %881 = vdwg.mxu0
        %883 = vrot.lane.b32.xlu0 %v781, 96
        %v884 = vpop.permute.xlu0 %883
        %v886 = vsel %vm786, %v777, 0
        %v889 = vsel %vm786, %v884, 0
        %891 = vmatprep.subr.bf16.mxu0 0
        %892 = vmatpush1.bf16.xpose.msra.mxu0 0
        %893 = vmatprep.subr.bf16.mxu0 0
        %894 = vmatpush1.bf16.xpose.msra.mxu0 0
        %895 = vmatprep.subr.bf16.mxu0 0
        %896 = vmatpush1.bf16.xpose.msra.mxu0 0
        %897 = vmatprep.subr.bf16.mxu0 0
        %898 = vmatpush1.bf16.xpose.msra.mxu0 0
        %899 = vmatprep.subr.bf16.mxu0 0
        %900 = vmatpush1.bf16.xpose.msra.mxu0 0
        %901 = vmatprep.subr.bf16.mxu0 0
        %902 = vmatpush1.bf16.xpose.msra.mxu0 0
        %903 = vmatprep.subr.bf16.mxu0 0
        %904 = vmatpush1.bf16.xpose.msra.mxu0 0
        %905 = vmatprep.subr.bf16.mxu0 0
        %906 = vmatpush1.bf16.xpose.msra.mxu0 %v889
        %907 = vmatprep.subr.bf16.mxu0 0
        %908 = vmatpush2.bf16.xpose.msra.mxu0 0
        %909 = vmatprep.subr.bf16.mxu0 0
        %910 = vmatpush2.bf16.xpose.msra.mxu0 0
        %911 = vmatprep.subr.bf16.mxu0 0
        %912 = vmatpush2.bf16.xpose.msra.mxu0 0
        %913 = vmatprep.subr.bf16.mxu0 0
        %914 = vmatpush2.bf16.xpose.msra.mxu0 0
        %915 = vmatprep.subr.bf16.mxu0 0
        %916 = vmatpush2.bf16.xpose.msra.mxu0 0
        %917 = vmatprep.subr.bf16.mxu0 0
        %918 = vmatpush2.bf16.xpose.msra.mxu0 0
        %919 = vmatprep.subr.bf16.mxu0 0
        %920 = vmatpush2.bf16.xpose.msra.mxu0 0
        %921 = vmatprep.subr.bf16.mxu0 0
        %922 = vmatpush2.bf16.xpose.msra.mxu0 0
        %923 = vmatprep.mubr.bf16.mxu0 0
        %924 = vmatmul.mubr.bf16.gmra.mxu0 %v886
        %v925 = vpop.f32.mrf.mxu0
        %v926 = vadd.f32 0.0, %v925
        %v927 = vpop.f32.mrf.mxu0
        %v928 = vpop.f32.mrf.mxu0
        %v929 = vpop.f32.mrf.mxu0
        %930 = vdwg.mxu0
        %932 = vrot.lane.b32.xlu0 %v782, 96
        %v933 = vpop.permute.xlu0 %932
        %v935 = vsel %vm786, %v778, 0
        %v938 = vsel %vm786, %v933, 0
        %940 = vmatprep.subr.bf16.mxu0 0
        %941 = vmatpush1.bf16.xpose.msra.mxu0 0
        %942 = vmatprep.subr.bf16.mxu0 0
        %943 = vmatpush1.bf16.xpose.msra.mxu0 0
        %944 = vmatprep.subr.bf16.mxu0 0
        %945 = vmatpush1.bf16.xpose.msra.mxu0 0
        %946 = vmatprep.subr.bf16.mxu0 0
        %947 = vmatpush1.bf16.xpose.msra.mxu0 0
        %948 = vmatprep.subr.bf16.mxu0 0
        %949 = vmatpush1.bf16.xpose.msra.mxu0 0
        %950 = vmatprep.subr.bf16.mxu0 0
        %951 = vmatpush1.bf16.xpose.msra.mxu0 0
        %952 = vmatprep.subr.bf16.mxu0 0
        %953 = vmatpush1.bf16.xpose.msra.mxu0 0
        %954 = vmatprep.subr.bf16.mxu0 0
        %955 = vmatpush1.bf16.xpose.msra.mxu0 %v938
        %956 = vmatprep.subr.bf16.mxu0 0
        %957 = vmatpush2.bf16.xpose.msra.mxu0 0
        %958 = vmatprep.subr.bf16.mxu0 0
        %959 = vmatpush2.bf16.xpose.msra.mxu0 0
        %960 = vmatprep.subr.bf16.mxu0 0
        %961 = vmatpush2.bf16.xpose.msra.mxu0 0
        %962 = vmatprep.subr.bf16.mxu0 0
        %963 = vmatpush2.bf16.xpose.msra.mxu0 0
        %964 = vmatprep.subr.bf16.mxu0 0
        %965 = vmatpush2.bf16.xpose.msra.mxu0 0
        %966 = vmatprep.subr.bf16.mxu0 0
        %967 = vmatpush2.bf16.xpose.msra.mxu0 0
        %968 = vmatprep.subr.bf16.mxu0 0
        %969 = vmatpush2.bf16.xpose.msra.mxu0 0
        %970 = vmatprep.subr.bf16.mxu0 0
        %971 = vmatpush2.bf16.xpose.msra.mxu0 0
        %972 = vmatprep.mubr.bf16.mxu0 0
        %973 = vmatmul.mubr.bf16.gmra.mxu0 %v935
        %v974 = vpop.f32.mrf.mxu0
        %v975 = vadd.f32 0.0, %v974
        %v976 = vpop.f32.mrf.mxu0
        %v977 = vpop.f32.mrf.mxu0
        %v978 = vpop.f32.mrf.mxu0
        %979 = vdwg.mxu0
        %v980 = vsel %vm786, %v828, -inf
        %981 = vmax.xlane.f32.xlu0 %v980
        %v982 = vpop.xlane.xlu0 %981
        %v983 = vsel %vm786, %v877, -inf
        %984 = vmax.xlane.f32.xlu0 %v983
        %v985 = vpop.xlane.xlu0 %984
        %v986 = vsel %vm786, %v926, -inf
        %987 = vmax.xlane.f32.xlu0 %v986
        %v988 = vpop.xlane.xlu0 %987
        %v989 = vsel %vm786, %v975, -inf
        %990 = vmax.xlane.f32.xlu0 %v989
        %v991 = vpop.xlane.xlu0 %990
        %v992 = vsub.f32 %v828, %v982
        %v993 = vsub.f32 %v877, %v985
        %v994 = vsub.f32 %v926, %v988
        %v995 = vsub.f32 %v975, %v991
        %v996 = vmul.f32 %v992, 1.442695
        %v997 = vpow.pop %v996
        %v998 = vmul.f32 %v993, 1.442695
        %v999 = vpow.pop %v998
        %v1000 = vmul.f32 %v994, 1.442695
        %v1001 = vpow.pop %v1000
        %v1002 = vmul.f32 %v995, 1.442695
        %v1003 = vpow.pop %v1002
        %v1004 = vsel %vm786, %v997, 0.0
        %1005 = vadd.xlane.f32.xlu0 %v1004
        %v1006 = vpop.xlane.xlu0 %1005
        %v1007 = vsel %vm786, %v999, 0.0
        %1008 = vadd.xlane.f32.xlu0 %v1007
        %v1009 = vpop.xlane.xlu0 %1008
        %v1010 = vsel %vm786, %v1001, 0.0
        %1011 = vadd.xlane.f32.xlu0 %v1010
        %v1012 = vpop.xlane.xlu0 %1011
        %v1013 = vsel %vm786, %v1003, 0.0
        %1014 = vadd.xlane.f32.xlu0 %v1013
        %v1015 = vpop.xlane.xlu0 %1014
        %v1016 = vrcp.pop %v1006
        %v1017 = vmul.f32 %v997, %v1016
        %v1018 = vrcp.pop %v1009
        %v1019 = vmul.f32 %v999, %v1018
        %v1020 = vrcp.pop %v1012
        %v1021 = vmul.f32 %v1001, %v1020
        %v1022 = vrcp.pop %v1015
        %v1023 = vmul.f32 %v1003, %v1022
        %1024 = vst.msk [vmem:[%s633] sm:$0xff] %vm786, %v1017
        %1025 = vst.msk [vmem:[%s633 + $0x8] sm:$0xff] %vm786, %v1019
        %1026 = vst.msk [vmem:[%s633 + $0x10] sm:$0xff] %vm786, %v1021
        %1027 = vst.msk [vmem:[%s633 + $0x18] sm:$0xff] %vm786, %v1023
        %v1028 = vpack.c.bf16 %v1017, %v1017
        %v1029 = vpack.c.bf16 %v1019, %v1019
        %v1030 = vpack.c.bf16 %v1021, %v1021
        %v1031 = vpack.c.bf16 %v1023, %v1023
        %1032 = vrot.lane.b32.xlu0 %v779, 64
        %v1033 = vpop.permute.xlu0 %1032
        %v1035 = vsel %vm786, %v1028, 0
        %vm1037 = vcmask 1043456
        %v1039 = vsel %vm1037, %v1033, 0
        %1041 = vmatprep.subr.bf16.mxu0 0
        %1042 = vmatpush1.bf16.msra.mxu0 0
        %1043 = vmatprep.subr.bf16.mxu0 0
        %1044 = vmatpush1.bf16.msra.mxu0 0
        %1045 = vmatprep.subr.bf16.mxu0 0
        %1046 = vmatpush1.bf16.msra.mxu0 0
        %1047 = vmatprep.subr.bf16.mxu0 0
        %1048 = vmatpush1.bf16.msra.mxu0 0
        %1049 = vmatprep.subr.bf16.mxu0 0
        %1050 = vmatpush1.bf16.msra.mxu0 0
        %1051 = vmatprep.subr.bf16.mxu0 0
        %1052 = vmatpush1.bf16.msra.mxu0 0
        %1053 = vmatprep.subr.bf16.mxu0 0
        %1054 = vmatpush1.bf16.msra.mxu0 0
        %1055 = vmatprep.subr.bf16.mxu0 0
        %1056 = vmatpush1.bf16.msra.mxu0 %v1039
        %1057 = vmatprep.subr.bf16.mxu0 0
        %1058 = vmatpush2.bf16.msra.mxu0 0
        %1059 = vmatprep.subr.bf16.mxu0 0
        %1060 = vmatpush2.bf16.msra.mxu0 0
        %1061 = vmatprep.subr.bf16.mxu0 0
        %1062 = vmatpush2.bf16.msra.mxu0 0
        %1063 = vmatprep.subr.bf16.mxu0 0
        %1064 = vmatpush2.bf16.msra.mxu0 0
        %1065 = vmatprep.subr.bf16.mxu0 0
        %1066 = vmatpush2.bf16.msra.mxu0 0
        %1067 = vmatprep.subr.bf16.mxu0 0
        %1068 = vmatpush2.bf16.msra.mxu0 0
        %1069 = vmatprep.subr.bf16.mxu0 0
        %1070 = vmatpush2.bf16.msra.mxu0 0
        %1071 = vmatprep.subr.bf16.mxu0 0
        %1072 = vmatpush2.bf16.msra.mxu0 0
        %1073 = vmatprep.mubr.bf16.mxu0 0
        %1074 = vmatmul.mubr.bf16.gmra.mxu0 %v1035
        %v1075 = vpop.f32.mrf.mxu0
        %v1076 = vadd.f32 0.0, %v1075
        %v1077 = vpop.f32.mrf.mxu0
        %v1078 = vpop.f32.mrf.mxu0
        %v1079 = vpop.f32.mrf.mxu0
        %1080 = vdwg.mxu0
        %1081 = vrot.lane.b32.xlu0 %v780, 64
        %v1082 = vpop.permute.xlu0 %1081
        %v1084 = vsel %vm786, %v1029, 0
        %v1087 = vsel %vm1037, %v1082, 0
        %1089 = vmatprep.subr.bf16.mxu0 0
        %1090 = vmatpush1.bf16.msra.mxu0 0
        %1091 = vmatprep.subr.bf16.mxu0 0
        %1092 = vmatpush1.bf16.msra.mxu0 0
        %1093 = vmatprep.subr.bf16.mxu0 0
        %1094 = vmatpush1.bf16.msra.mxu0 0
        %1095 = vmatprep.subr.bf16.mxu0 0
        %1096 = vmatpush1.bf16.msra.mxu0 0
        %1097 = vmatprep.subr.bf16.mxu0 0
        %1098 = vmatpush1.bf16.msra.mxu0 0
        %1099 = vmatprep.subr.bf16.mxu0 0
        %1100 = vmatpush1.bf16.msra.mxu0 0
        %1101 = vmatprep.subr.bf16.mxu0 0
        %1102 = vmatpush1.bf16.msra.mxu0 0
        %1103 = vmatprep.subr.bf16.mxu0 0
        %1104 = vmatpush1.bf16.msra.mxu0 %v1087
        %1105 = vmatprep.subr.bf16.mxu0 0
        %1106 = vmatpush2.bf16.msra.mxu0 0
        %1107 = vmatprep.subr.bf16.mxu0 0
        %1108 = vmatpush2.bf16.msra.mxu0 0
        %1109 = vmatprep.subr.bf16.mxu0 0
        %1110 = vmatpush2.bf16.msra.mxu0 0
        %1111 = vmatprep.subr.bf16.mxu0 0
        %1112 = vmatpush2.bf16.msra.mxu0 0
        %1113 = vmatprep.subr.bf16.mxu0 0
        %1114 = vmatpush2.bf16.msra.mxu0 0
        %1115 = vmatprep.subr.bf16.mxu0 0
        %1116 = vmatpush2.bf16.msra.mxu0 0
        %1117 = vmatprep.subr.bf16.mxu0 0
        %1118 = vmatpush2.bf16.msra.mxu0 0
        %1119 = vmatprep.subr.bf16.mxu0 0
        %1120 = vmatpush2.bf16.msra.mxu0 0
        %1121 = vmatprep.mubr.bf16.mxu0 0
        %1122 = vmatmul.mubr.bf16.gmra.mxu0 %v1084
        %v1123 = vpop.f32.mrf.mxu0
        %v1124 = vadd.f32 0.0, %v1123
        %v1125 = vpop.f32.mrf.mxu0
        %v1126 = vpop.f32.mrf.mxu0
        %v1127 = vpop.f32.mrf.mxu0
        %1128 = vdwg.mxu0
        %1129 = vrot.lane.b32.xlu0 %v781, 64
        %v1130 = vpop.permute.xlu0 %1129
        %v1132 = vsel %vm786, %v1030, 0
        %v1135 = vsel %vm1037, %v1130, 0
        %1137 = vmatprep.subr.bf16.mxu0 0
        %1138 = vmatpush1.bf16.msra.mxu0 0
        %1139 = vmatprep.subr.bf16.mxu0 0
        %1140 = vmatpush1.bf16.msra.mxu0 0
        %1141 = vmatprep.subr.bf16.mxu0 0
        %1142 = vmatpush1.bf16.msra.mxu0 0
        %1143 = vmatprep.subr.bf16.mxu0 0
        %1144 = vmatpush1.bf16.msra.mxu0 0
        %1145 = vmatprep.subr.bf16.mxu0 0
        %1146 = vmatpush1.bf16.msra.mxu0 0
        %1147 = vmatprep.subr.bf16.mxu0 0
        %1148 = vmatpush1.bf16.msra.mxu0 0
        %1149 = vmatprep.subr.bf16.mxu0 0
        %1150 = vmatpush1.bf16.msra.mxu0 0
        %1151 = vmatprep.subr.bf16.mxu0 0
        %1152 = vmatpush1.bf16.msra.mxu0 %v1135
        %1153 = vmatprep.subr.bf16.mxu0 0
        %1154 = vmatpush2.bf16.msra.mxu0 0
        %1155 = vmatprep.subr.bf16.mxu0 0
        %1156 = vmatpush2.bf16.msra.mxu0 0
        %1157 = vmatprep.subr.bf16.mxu0 0
        %1158 = vmatpush2.bf16.msra.mxu0 0
        %1159 = vmatprep.subr.bf16.mxu0 0
        %1160 = vmatpush2.bf16.msra.mxu0 0
        %1161 = vmatprep.subr.bf16.mxu0 0
        %1162 = vmatpush2.bf16.msra.mxu0 0
        %1163 = vmatprep.subr.bf16.mxu0 0
        %1164 = vmatpush2.bf16.msra.mxu0 0
        %1165 = vmatprep.subr.bf16.mxu0 0
        %1166 = vmatpush2.bf16.msra.mxu0 0
        %1167 = vmatprep.subr.bf16.mxu0 0
        %1168 = vmatpush2.bf16.msra.mxu0 0
        %1169 = vmatprep.mubr.bf16.mxu0 0
        %1170 = vmatmul.mubr.bf16.gmra.mxu0 %v1132
        %v1171 = vpop.f32.mrf.mxu0
        %v1172 = vadd.f32 0.0, %v1171
        %v1173 = vpop.f32.mrf.mxu0
        %v1174 = vpop.f32.mrf.mxu0
        %v1175 = vpop.f32.mrf.mxu0
        %1176 = vdwg.mxu0
        %1177 = vrot.lane.b32.xlu0 %v782, 64
        %v1178 = vpop.permute.xlu0 %1177
        %v1180 = vsel %vm786, %v1031, 0
        %v1183 = vsel %vm1037, %v1178, 0
        %1185 = vmatprep.subr.bf16.mxu0 0
        %1186 = vmatpush1.bf16.msra.mxu0 0
        %1187 = vmatprep.subr.bf16.mxu0 0
        %1188 = vmatpush1.bf16.msra.mxu0 0
        %1189 = vmatprep.subr.bf16.mxu0 0
        %1190 = vmatpush1.bf16.msra.mxu0 0
        %1191 = vmatprep.subr.bf16.mxu0 0
        %1192 = vmatpush1.bf16.msra.mxu0 0
        %1193 = vmatprep.subr.bf16.mxu0 0
        %1194 = vmatpush1.bf16.msra.mxu0 0
        %1195 = vmatprep.subr.bf16.mxu0 0
        %1196 = vmatpush1.bf16.msra.mxu0 0
        %1197 = vmatprep.subr.bf16.mxu0 0
        %1198 = vmatpush1.bf16.msra.mxu0 0
        %1199 = vmatprep.subr.bf16.mxu0 0
        %1200 = vmatpush1.bf16.msra.mxu0 %v1183
        %1201 = vmatprep.subr.bf16.mxu0 0
        %1202 = vmatpush2.bf16.msra.mxu0 0
        %1203 = vmatprep.subr.bf16.mxu0 0
        %1204 = vmatpush2.bf16.msra.mxu0 0
        %1205 = vmatprep.subr.bf16.mxu0 0
        %1206 = vmatpush2.bf16.msra.mxu0 0
        %1207 = vmatprep.subr.bf16.mxu0 0
        %1208 = vmatpush2.bf16.msra.mxu0 0
        %1209 = vmatprep.subr.bf16.mxu0 0
        %1210 = vmatpush2.bf16.msra.mxu0 0
        %1211 = vmatprep.subr.bf16.mxu0 0
        %1212 = vmatpush2.bf16.msra.mxu0 0
        %1213 = vmatprep.subr.bf16.mxu0 0
        %1214 = vmatpush2.bf16.msra.mxu0 0
        %1215 = vmatprep.subr.bf16.mxu0 0
        %1216 = vmatpush2.bf16.msra.mxu0 0
        %1217 = vmatprep.mubr.bf16.mxu0 0
        %1218 = vmatmul.mubr.bf16.gmra.mxu0 %v1180
        %v1219 = vpop.f32.mrf.mxu0
        %v1220 = vadd.f32 0.0, %v1219
        %v1221 = vpop.f32.mrf.mxu0
        %v1222 = vpop.f32.mrf.mxu0
        %v1223 = vpop.f32.mrf.mxu0
        %1224 = vdwg.mxu0
        %1226 = vrot.lane.b32.xlu0 %v1124, 8
        %v1227 = vpop.permute.xlu0 %1226
        %1230 = vrot.lane.b32.xlu0 %v1172, 16
        %v1231 = vpop.permute.xlu0 %1230
        %1234 = vrot.lane.b32.xlu0 %v1220, 24
        %v1235 = vpop.permute.xlu0 %1234
        %v1237 = vsel %vm786, %v1076, %v1227
        %vm1238 = vcmask 130048
        %v1239 = vsel %vm1238, %v1237, %v1231
        %vm1240 = vcmask 195584
        %v1241 = vsel %vm1240, %v1239, %v1235
        %v1242 = vpack.c.bf16 %v1241, %v1241
        %v1243 = vld [vmem:[%s650] sm:$0xf]
        %v1244 = vld [vmem:[%s650 + $0x4] sm:$0xf]
        %v1245 = vld [vmem:[%s650 + $0x8] sm:$0xf]
        %v1246 = vld [vmem:[%s650 + $0xc] sm:$0xf]
        %v1247 = vld [vmem:[%s653] sm:$0x1]
        %v1249 = vlaneseq
        %v1250 = vshrl.u32 %v1249, 7
        %v1251 = vsub.s32 0, %v1250
        %v1252 = vrot.slane %v1247, %v1251
        %v1258 = vunpack.c.l.b16 %v1243
        %v1259 = vunpack.c.l.b16 %v1244
        %v1260 = vunpack.c.l.b16 %v1245
        %v1261 = vunpack.c.l.b16 %v1246
        %v1262 = vpack.c.b16 %v1259, %v1258
        %v1263 = vpack.c.b16 %v1261, %v1260
        %v1267 = vsel %vm717, %v1242, 0
        %1269 = vmatprep.subr.bf16.mxu0 0
        %1270 = vmatpush1.bf16.msra.mxu0 0
        %1271 = vmatprep.subr.bf16.mxu0 0
        %1272 = vmatpush1.bf16.msra.mxu0 0
        %1273 = vmatprep.subr.bf16.mxu0 0
        %1274 = vmatpush1.bf16.msra.mxu0 0
        %1275 = vmatprep.subr.bf16.mxu0 0
        %1276 = vmatpush1.bf16.msra.mxu0 0
        %1277 = vmatprep.subr.bf16.mxu0 0
        %1278 = vmatpush1.bf16.msra.mxu0 0
        %1279 = vmatprep.subr.bf16.mxu0 0
        %1280 = vmatpush1.bf16.msra.mxu0 0
        %1281 = vmatprep.subr.bf16.mxu0 0
        %1282 = vmatpush1.bf16.msra.mxu0 %v1263
        %1283 = vmatprep.subr.bf16.mxu0 0
        %1284 = vmatpush1.bf16.msra.mxu0 %v1262
        %1285 = vmatprep.subr.bf16.mxu0 0
        %1286 = vmatpush2.bf16.msra.mxu0 0
        %1287 = vmatprep.subr.bf16.mxu0 0
        %1288 = vmatpush2.bf16.msra.mxu0 0
        %1289 = vmatprep.subr.bf16.mxu0 0
        %1290 = vmatpush2.bf16.msra.mxu0 0
        %1291 = vmatprep.subr.bf16.mxu0 0
        %1292 = vmatpush2.bf16.msra.mxu0 0
        %1293 = vmatprep.subr.bf16.mxu0 0
        %1294 = vmatpush2.bf16.msra.mxu0 0
        %1295 = vmatprep.subr.bf16.mxu0 0
        %1296 = vmatpush2.bf16.msra.mxu0 0
        %1297 = vmatprep.subr.bf16.mxu0 0
        %1298 = vmatpush2.bf16.msra.mxu0 0
        %1299 = vmatprep.subr.bf16.mxu0 0
        %1300 = vmatpush2.bf16.msra.mxu0 0
        %1301 = vmatprep.mubr.bf16.mxu0 0
        %1302 = vmatmul.mubr.bf16.gmra.mxu0 %v1267
        %v1303 = vpop.f32.mrf.mxu0
        %v1304 = vadd.f32 %v1252, %v1303
        %v1305 = vpop.f32.mrf.mxu0
        %v1306 = vpop.f32.mrf.mxu0
        %v1307 = vpop.f32.mrf.mxu0
        %1308 = vdwg.mxu0
        %v1309 = vadd.f32 %v692, %v1304
        %v1310 = vld [vmem:[%s656] sm:$0x1]
        %v1311 = vld [vmem:[%s659] sm:$0x1]
        %v1312 = vsel %vm717, %v1309, 0.0
        %1313 = vadd.xlane.f32.xlu0 %v1312
        %v1314 = vpop.xlane.xlu0 %1313
        %v1315 = vrcp.pop 32.0
        %v1316 = vmul.f32 %v1314, %v1315
        %v1317 = vsub.f32 %v1309, %v1316
        %v1318 = vmul.f32 %v1317, %v1317
        %v1319 = vsel %vm717, %v1318, 0.0
        %1320 = vadd.xlane.f32.xlu0 %v1319
        %v1321 = vpop.xlane.xlu0 %1320
        %v1322 = vmul.f32 %v1321, %v1315
        %v1323 = vadd.f32 %v1322, 1e-05
        %v1324 = vrsqrt.pop %v1323
        %v1325 = vmul.f32 %v1317, %v1324
        %v1327 = vlaneseq
        %v1328 = vshrl.u32 %v1327, 7
        %v1329 = vsub.s32 0, %v1328
        %v1330 = vrot.slane %v1310, %v1329
        %v1332 = vmul.f32 %v1325, %v1330
        %v1334 = vlaneseq
        %v1335 = vshrl.u32 %v1334, 7
        %v1336 = vsub.s32 0, %v1335
        %v1337 = vrot.slane %v1311, %v1336
        %v1339 = vadd.f32 %v1332, %v1337
        %v1340 = vpack.c.bf16 %v1339, %v1339
        %v1341 = vld [vmem:[%s664] sm:$0xf]
        %v1342 = vld [vmem:[%s664 + $0x4] sm:$0xf]
        %v1343 = vld [vmem:[%s664 + $0x8] sm:$0xf]
        %v1344 = vld [vmem:[%s664 + $0xc] sm:$0xf]
        %v1345 = vld [vmem:[%s667] sm:$0x1]
        %v1347 = vlaneseq
        %v1348 = vshrl.u32 %v1347, 7
        %v1349 = vsub.s32 0, %v1348
        %v1350 = vrot.slane %v1345, %v1349
        %v1356 = vunpack.c.l.b16 %v1341
        %v1357 = vunpack.c.l.b16 %v1342
        %v1358 = vunpack.c.l.b16 %v1343
        %v1359 = vunpack.c.l.b16 %v1344
        %v1360 = vpack.c.b16 %v1357, %v1356
        %v1361 = vpack.c.b16 %v1359, %v1358
        %v1365 = vsel %vm717, %v1340, 0
        %1367 = vmatprep.subr.bf16.mxu0 0
        %1368 = vmatpush1.bf16.msra.mxu0 0
        %1369 = vmatprep.subr.bf16.mxu0 0
        %1370 = vmatpush1.bf16.msra.mxu0 0
        %1371 = vmatprep.subr.bf16.mxu0 0
        %1372 = vmatpush1.bf16.msra.mxu0 0
        %1373 = vmatprep.subr.bf16.mxu0 0
        %1374 = vmatpush1.bf16.msra.mxu0 0
        %1375 = vmatprep.subr.bf16.mxu0 0
        %1376 = vmatpush1.bf16.msra.mxu0 0
        %1377 = vmatprep.subr.bf16.mxu0 0
        %1378 = vmatpush1.bf16.msra.mxu0 0
        %1379 = vmatprep.subr.bf16.mxu0 0
        %1380 = vmatpush1.bf16.msra.mxu0 %v1361
        %1381 = vmatprep.subr.bf16.mxu0 0
        %1382 = vmatpush1.bf16.msra.mxu0 %v1360
        %1383 = vmatprep.subr.bf16.mxu0 0
        %1384 = vmatpush2.bf16.msra.mxu0 0
        %1385 = vmatprep.subr.bf16.mxu0 0
        %1386 = vmatpush2.bf16.msra.mxu0 0
        %1387 = vmatprep.subr.bf16.mxu0 0
        %1388 = vmatpush2.bf16.msra.mxu0 0
        %1389 = vmatprep.subr.bf16.mxu0 0
        %1390 = vmatpush2.bf16.msra.mxu0 0
        %1391 = vmatprep.subr.bf16.mxu0 0
        %1392 = vmatpush2.bf16.msra.mxu0 0
        %1393 = vmatprep.subr.bf16.mxu0 0
        %1394 = vmatpush2.bf16.msra.mxu0 0
        %1395 = vmatprep.subr.bf16.mxu0 0
        %1396 = vmatpush2.bf16.msra.mxu0 0
        %1397 = vmatprep.subr.bf16.mxu0 0
        %1398 = vmatpush2.bf16.msra.mxu0 0
        %1399 = vmatprep.mubr.bf16.mxu0 0
        %1400 = vmatmul.mubr.bf16.gmra.mxu0 %v1365
        %v1401 = vpop.f32.mrf.mxu0
        %v1402 = vadd.f32 %v1350, %v1401
        %v1403 = vpop.f32.mrf.mxu0
        %v1404 = vpop.f32.mrf.mxu0
        %v1405 = vpop.f32.mrf.mxu0
        %1406 = vdwg.mxu0
        %v1407 = vmax.f32 %v1402, 0.0
        %v1408 = vpack.c.bf16 %v1407, %v1407
        %v1409 = vld [vmem:[%s672] sm:$0xf]
        %v1410 = vld [vmem:[%s672 + $0x4] sm:$0xf]
        %v1411 = vld [vmem:[%s672 + $0x8] sm:$0xf]
        %v1412 = vld [vmem:[%s672 + $0xc] sm:$0xf]
        %v1413 = vld [vmem:[%s672 + $0x10] sm:$0xf]
        %v1414 = vld [vmem:[%s672 + $0x14] sm:$0xf]
        %v1415 = vld [vmem:[%s672 + $0x18] sm:$0xf]
        %v1416 = vld [vmem:[%s672 + $0x1c] sm:$0xf]
        %v1417 = vld [vmem:[%s672 + $0x20] sm:$0xf]
        %v1418 = vld [vmem:[%s672 + $0x24] sm:$0xf]
        %v1419 = vld [vmem:[%s672 + $0x28] sm:$0xf]
        %v1420 = vld [vmem:[%s672 + $0x2c] sm:$0xf]
        %v1421 = vld [vmem:[%s672 + $0x30] sm:$0xf]
        %v1422 = vld [vmem:[%s672 + $0x34] sm:$0xf]
        %v1423 = vld [vmem:[%s672 + $0x38] sm:$0xf]
        %v1424 = vld [vmem:[%s672 + $0x3c] sm:$0xf]
        %v1425 = vld [vmem:[%s675] sm:$0x1]
        %v1427 = vlaneseq
        %v1428 = vshrl.u32 %v1427, 7
        %v1429 = vsub.s32 0, %v1428
        %v1430 = vrot.slane %v1425, %v1429
        %v1448 = vunpack.c.l.b16 %v1409
        %v1449 = vunpack.c.l.b16 %v1410
        %v1450 = vunpack.c.l.b16 %v1411
        %v1451 = vunpack.c.l.b16 %v1412
        %v1452 = vunpack.c.l.b16 %v1413
        %v1453 = vunpack.c.l.b16 %v1414
        %v1454 = vunpack.c.l.b16 %v1415
        %v1455 = vunpack.c.l.b16 %v1416
        %v1456 = vunpack.c.l.b16 %v1417
        %v1457 = vunpack.c.l.b16 %v1418
        %v1458 = vunpack.c.l.b16 %v1419
        %v1459 = vunpack.c.l.b16 %v1420
        %v1460 = vunpack.c.l.b16 %v1421
        %v1461 = vunpack.c.l.b16 %v1422
        %v1462 = vunpack.c.l.b16 %v1423
        %v1463 = vunpack.c.l.b16 %v1424
        %v1464 = vpack.c.b16 %v1449, %v1448
        %v1465 = vpack.c.b16 %v1451, %v1450
        %v1466 = vpack.c.b16 %v1453, %v1452
        %v1467 = vpack.c.b16 %v1455, %v1454
        %v1468 = vpack.c.b16 %v1457, %v1456
        %v1469 = vpack.c.b16 %v1459, %v1458
        %v1470 = vpack.c.b16 %v1461, %v1460
        %v1471 = vpack.c.b16 %v1463, %v1462
        %1480 = vmatprep.subr.bf16.mxu0 0
        %1481 = vmatpush1.bf16.msra.mxu0 %v1471
        %1482 = vmatprep.subr.bf16.mxu0 0
        %1483 = vmatpush1.bf16.msra.mxu0 %v1470
        %1484 = vmatprep.subr.bf16.mxu0 0
        %1485 = vmatpush1.bf16.msra.mxu0 %v1469
        %1486 = vmatprep.subr.bf16.mxu0 0
        %1487 = vmatpush1.bf16.msra.mxu0 %v1468
        %1488 = vmatprep.subr.bf16.mxu0 0
        %1489 = vmatpush1.bf16.msra.mxu0 %v1467
        %1490 = vmatprep.subr.bf16.mxu0 0
        %1491 = vmatpush1.bf16.msra.mxu0 %v1466
        %1492 = vmatprep.subr.bf16.mxu0 0
        %1493 = vmatpush1.bf16.msra.mxu0 %v1465
        %1494 = vmatprep.subr.bf16.mxu0 0
        %1495 = vmatpush1.bf16.msra.mxu0 %v1464
        %1496 = vmatprep.subr.bf16.mxu0 0
        %1497 = vmatpush2.bf16.msra.mxu0 0
        %1498 = vmatprep.subr.bf16.mxu0 0
        %1499 = vmatpush2.bf16.msra.mxu0 0
        %1500 = vmatprep.subr.bf16.mxu0 0
        %1501 = vmatpush2.bf16.msra.mxu0 0
        %1502 = vmatprep.subr.bf16.mxu0 0
        %1503 = vmatpush2.bf16.msra.mxu0 0
        %1504 = vmatprep.subr.bf16.mxu0 0
        %1505 = vmatpush2.bf16.msra.mxu0 0
        %1506 = vmatprep.subr.bf16.mxu0 0
        %1507 = vmatpush2.bf16.msra.mxu0 0
        %1508 = vmatprep.subr.bf16.mxu0 0
        %1509 = vmatpush2.bf16.msra.mxu0 0
        %1510 = vmatprep.subr.bf16.mxu0 0
        %1511 = vmatpush2.bf16.msra.mxu0 0
        %1512 = vmatprep.mubr.bf16.mxu0 0
        %1513 = vmatmul.mubr.bf16.gmra.mxu0 %v1408
        %v1514 = vpop.f32.mrf.mxu0
        %v1515 = vadd.f32 %v1430, %v1514
        %v1516 = vpop.f32.mrf.mxu0
        %v1517 = vpop.f32.mrf.mxu0
        %v1518 = vpop.f32.mrf.mxu0
        %1519 = vdwg.mxu0
        %v1520 = vadd.f32 %v1339, %v1515
        %v1521 = vld [vmem:[%s678] sm:$0x1]
        %v1522 = vld [vmem:[%s681] sm:$0x1]
        %v1523 = vsel %vm717, %v1520, 0.0
        %1524 = vadd.xlane.f32.xlu0 %v1523
        %v1525 = vpop.xlane.xlu0 %1524
        %v1526 = vmul.f32 %v1525, %v1315
        %v1527 = vsub.f32 %v1520, %v1526
        %v1528 = vmul.f32 %v1527, %v1527
        %v1529 = vsel %vm717, %v1528, 0.0
        %1530 = vadd.xlane.f32.xlu0 %v1529
        %v1531 = vpop.xlane.xlu0 %1530
        %v1532 = vmul.f32 %v1531, %v1315
        %v1533 = vadd.f32 %v1532, 1e-05
        %v1534 = vrsqrt.pop %v1533
        %v1535 = vmul.f32 %v1527, %v1534
        %v1537 = vlaneseq
        %v1538 = vshrl.u32 %v1537, 7
        %v1539 = vsub.s32 0, %v1538
        %v1540 = vrot.slane %v1521, %v1539
        %v1542 = vmul.f32 %v1535, %v1540
        %v1544 = vlaneseq
        %v1545 = vshrl.u32 %v1544, 7
        %v1546 = vsub.s32 0, %v1545
        %v1547 = vrot.slane %v1522, %v1546
        %v1549 = vadd.f32 %v1542, %v1547
        %1550 = vst.msk [vmem:[#allocation2] sm:$0xff] %vm717, %v1549
        %1551 = vst.msk [vmem:[%s626] sm:$0xff] %vm717, %v1549
        %s1552 = sand.u32 %s390, 1
        %s1553 = scalar_lea.sflag [#allocation4], %s1552
        %s1554 = sand.u32 %s390, 1
        %s1555 = smul.addr %s1554, 8
        %s1556 = scalar_lea.vmem [#allocation3], %s1555
        %s1557 = sand.u32 %s420, 1
        %s1558 = scalar_lea.sflag [#allocation6], %s1557
        %s1559 = sand.u32 %s420, 1
        %s1560 = smul.addr %s1559, 32
        %s1561 = scalar_lea.vmem [#allocation5], %s1560
        // Predicated region
        $region77: #{tpu_custom_call.1} parent=71 // pred_check
          %p1562 = pneg %p400
        $region78: #{tpu_custom_call.1} parent=71 // pred_check_branch
          %1564 = sbr.rel (%p1562) target = $region80
        $region79: #{tpu_custom_call.1} parent=71 // pred_region
          %s1566 = ssub.s32 128, 128
          %1567 = vsyncadd %s1553, %s1566
          %s1568 = smul.addr %s36, 128
          %s1569 = scalar_lea.hbm %s13, %s1568
          %s1571 = sshll.u32 %s1556, 4
          %s1572 = int_to_ptr.vmem [resolvable:$true] %s1571
          %1574 = dma.vmem_to_hbm [thread:$0]  %s1572, 128, %s1569, %s1553
        $region80: #{tpu_custom_call.1} parent=71 // pred_fallthru
          _
        // Predicated region
        $region81: #{tpu_custom_call.1} parent=71 // pred_check
          %p1575 = pneg %p430
        $region82: #{tpu_custom_call.1} parent=71 // pred_check_branch
          %1577 = sbr.rel (%p1575) target = $region84
        $region83: #{tpu_custom_call.1} parent=71 // pred_region
          %s1578 = smul.u32 %s36, 2
          %s1579 = sadd.s32 %s1578, %s37
          %s1581 = ssub.s32 512, 512
          %1582 = vsyncadd %s1558, %s1581
          %s1583 = smul.addr %s1579, 4
          %s1584 = smul.addr %s1583, 128
          %s1585 = scalar_lea.hbm %s14, %s1584
          %s1586 = sshll.u32 %s1561, 4
          %s1587 = int_to_ptr.vmem [resolvable:$true] %s1586
          %1592 = dma.vmem_to_hbm [thread:$0]  %s1587, 512, %s1585, %s1558, 128, 128, 8
        $region84: #{tpu_custom_call.1} parent=71 // pred_fallthru
          _
      $region72: #{tpu_custom_call.1} parent=5 // pred_fallthru
        _
      %p1593 = scmp.le.s32.totalorder 2, %s27
      // Predicated region
      $region85: #{tpu_custom_call.1} parent=5 // pred_check
        %p1594 = pneg %p1593
      $region86: #{tpu_custom_call.1} parent=5 // pred_check_branch
        %1596 = sbr.rel (%p1594) target = $region88
      $region87: #{tpu_custom_call.1} parent=5 // pred_region
        %s1597 = ssub.s32 %s27, 2
        // Predicated region
        $region89: #{tpu_custom_call.1} parent=87 // pred_check
          %p1598 = pneg %p406
        $region90: #{tpu_custom_call.1} parent=87 // pred_check_branch
          %1600 = sbr.rel (%p1598) target = $region92
        $region91: #{tpu_custom_call.1} parent=87 // pred_region
          %s1601 = sand.u32 %s391, 1
          %s1602 = scalar_lea.sflag [#allocation4], %s1601
          %s1603 = sand.u32 %s391, 1
          %s1604 = smul.addr %s1603, 8
          %s1605 = scalar_lea.vmem [#allocation3], %s1604
          %1606 = dma.done %s1602, 128
        $region92: #{tpu_custom_call.1} parent=87 // pred_fallthru
          _
        // Predicated region
        $region93: #{tpu_custom_call.1} parent=87 // pred_check
          %p1607 = pneg %p436
        $region94: #{tpu_custom_call.1} parent=87 // pred_check_branch
          %1609 = sbr.rel (%p1607) target = $region96
        $region95: #{tpu_custom_call.1} parent=87 // pred_region
          %s1610 = sand.u32 %s421, 1
          %s1611 = scalar_lea.sflag [#allocation6], %s1610
          %s1612 = sand.u32 %s421, 1
          %s1613 = smul.addr %s1612, 32
          %s1614 = scalar_lea.vmem [#allocation5], %s1613
          %1615 = dma.done %s1611, 512
        $region96: #{tpu_custom_call.1} parent=87 // pred_fallthru
          _
      $region88: #{tpu_custom_call.1} parent=5 // pred_fallthru
        _
    $region6: #{tpu_custom_call.1} parent=1 // loop_footer
      %s31 = sadd.s32 1, %s27
    $region7: #{tpu_custom_call.1} parent=1 // loop_footer_branch
      %26 = sbr.rel target = $region3
    $region8: #{tpu_custom_call.1} parent=1 // loop_exit
      _
    %1616 = vsyncpa [#allocation4], 1
    %s1617 = scalar_lea.sflag [#allocation4], 1
    %1618 = vsyncpa %s1617, 1
    %1619 = vsyncpa [#allocation6], 1
    %s1620 = scalar_lea.sflag [#allocation6], 1
    %1621 = vsyncpa %s1620, 1

</llo_original>
